<compile_context>
chip_gen: v5e
topology: v5e:2x2
jax: 0.10.0
libtpu: 0.0.40
codegen_flags: <defaults>
</compile_context>

<pallas_src>
import jax
import jax.numpy as jnp
from jax.experimental import pallas as pl
from jax.experimental.pallas import tpu as pltpu

IN_FEATS = 3 * 32 * 32      # 3072, already a multiple of 128
H1, H2, OUT = 120, 84, 10
PAD = 128                   # lane-padded width for all hidden/output dims


def _round_up(x, m):
    return (x + m - 1) // m * m


def boringnet_kernel(x_ref, w1_ref, b1_ref, w2_ref, b2_ref, w3_ref, b3_ref,
                     o_ref):
    # x_ref : (TM, 3072) f32         w1_ref: (3072, 128) bf16   b1_ref: (1, 128) f32
    # w2_ref: (128, 128) bf16        b2_ref: (1, 128) f32
    # w3_ref: (128, 128) bf16        b3_ref: (1, 128) f32       o_ref : (TM, 128) bf16
    # Cast the streamed f32 activations to bf16 in-kernel (hidden under the
    # HBM DMA); all matmuls accumulate in f32 on the MXU.
    x = x_ref[...].astype(w1_ref.dtype)

    h1 = jnp.dot(x, w1_ref[...], preferred_element_type=jnp.float32)
    h1 = jnp.maximum(h1 + b1_ref[...], 0.0)            # ReLU(lin1), f32

    h2 = jnp.dot(h1.astype(w2_ref.dtype), w2_ref[...],
                 preferred_element_type=jnp.float32)
    h2 = jnp.maximum(h2 + b2_ref[...], 0.0)            # ReLU(lin2), f32

    out = jnp.dot(h2.astype(w3_ref.dtype), w3_ref[...],
                  preferred_element_type=jnp.float32)
    out = out + b3_ref[...]                            # lin3 (no activation)

    o_ref[...] = out.astype(o_ref.dtype)               # lane-dense bf16 store


def prepare_params(params, compute_dtype=jnp.bfloat16):
    """One-time prep (keep OUT of the per-call hot path):
    transpose PyTorch (out,in) weights to (in,out), zero-pad feature dims to
    128 lanes, cast weights to bf16; biases stay f32 (zero-padded).  Padded
    columns/bias entries are exactly zero, so columns 0..OUT-1 are unchanged
    through ReLU and the final slice."""
    w1, b1, w2, b2, w3, b3 = params

    def pad_w(w_t, in_pad, out_pad):
        w_p = jnp.zeros((in_pad, out_pad), jnp.float32)
        w_p = w_p.at[:w_t.shape[0], :w_t.shape[1]].set(w_t)
        return w_p.astype(compute_dtype)

    def pad_b(b, out_pad):
        b_p = jnp.zeros((1, out_pad), jnp.float32)
        return b_p.at[0, :b.shape[0]].set(b)

    return (pad_w(w1.T, IN_FEATS, PAD), pad_b(b1, PAD),
            pad_w(w2.T, PAD, PAD),      pad_b(b2, PAD),
            pad_w(w3.T, PAD, PAD),      pad_b(b3, PAD))


def boringnet_forward(x_nchw, prepared, *, tile_m=1024,
                      vmem_limit_bytes=48 * 1024 * 1024):
    """x_nchw: (B, 3, 32, 32) float32. prepared: output of prepare_params.
    Returns (B, 10) float32 logits."""
    w1, b1, w2, b2, w3, b3 = prepared
    B = x_nchw.shape[0]

    # Flatten (matches x.view(-1, C*H*W)); this is a free view, no HBM pass.
    # x is streamed f32 and cast to bf16 inside the kernel.
    x = x_nchw.reshape(B, -1)                            # (B, 3072) f32
    K = x.shape[1]

    # Batch tile: multiple of 16 sublanes (bf16 packing), capped so there are
    # always >=2 roughly balanced grid steps when B > 16 (v7x 2-TC sharding;
    # harmless on single-TC v5e/v6e).  No wrapper-side padding: the grid uses
    # cdiv and the final partial tile's out-of-range rows are masked by Pallas.
    TM = min(tile_m, _round_up(pl.cdiv(B, 2), 16))
    n_tiles = pl.cdiv(B, TM)

    cost = pl.CostEstimate(
        flops=2 * B * (K * PAD + PAD * PAD + PAD * PAD),
        bytes_accessed=(B * K * 4                              # x in (f32)
                        + (K * PAD + 2 * PAD * PAD) * 2        # bf16 weights
                        + 3 * PAD * 4                          # f32 biases
                        + B * PAD * 2),                        # bf16 out
        transcendentals=0,
    )

    out = pl.pallas_call(
        boringnet_kernel,
        out_shape=jax.ShapeDtypeStruct((B, PAD), jnp.bfloat16),
        grid_spec=pltpu.PrefetchScalarGridSpec(
            num_scalar_prefetch=0,
            grid=(n_tiles,),
            in_specs=[
                pl.BlockSpec((TM, K), lambda i: (i, 0)),       # x: tiled over batch
                pl.BlockSpec((K, PAD), lambda i: (0, 0)),      # w1: VMEM-resident
                pl.BlockSpec((1, PAD), lambda i: (0, 0)),      # b1
                pl.BlockSpec((PAD, PAD), lambda i: (0, 0)),    # w2
                pl.BlockSpec((1, PAD), lambda i: (0, 0)),      # b2
                pl.BlockSpec((PAD, PAD), lambda i: (0, 0)),    # w3
                pl.BlockSpec((1, PAD), lambda i: (0, 0)),      # b3
            ],
            out_specs=pl.BlockSpec((TM, PAD), lambda i: (i, 0)),
        ),
        compiler_params=pltpu.CompilerParams(
            dimension_semantics=("parallel",),
            vmem_limit_bytes=vmem_limit_bytes,
        ),
        cost_estimate=cost,
    )(x, w1, b1, w2, b2, w3, b3)

    # Tiny epilogue: slice the 10 real logits and return f32 (40 B/row).
    return out[:, :OUT].astype(jnp.float32)


def init_params(key):
    """Deterministic init mimicking PyTorch nn.Linear defaults
    (uniform in +/- 1/sqrt(fan_in)), stored PyTorch-style as (out, in)."""
    dims = [(H1, IN_FEATS), (H2, H1), (OUT, H2)]
    params = []
    keys = jax.random.split(key, 2 * len(dims))
    for i, (out_f, in_f) in enumerate(dims):
        bound = 1.0 / (in_f ** 0.5)
        w = jax.random.uniform(keys[2 * i], (out_f, in_f), jnp.float32,
                               -bound, bound)
        b = jax.random.uniform(keys[2 * i + 1], (out_f,), jnp.float32,
                               -bound, bound)
        params += [w, b]
    return tuple(params)


if __name__ == "__main__":
    key = jax.random.PRNGKey(0)
    k_params, k_x = jax.random.split(key)

    params = init_params(k_params)
    prepared = prepare_params(params)          # one-time transpose/pad/cast

    # Input matches lin1's expected 3*32*32 flattened features.
    x = jax.random.normal(k_x, (2, 3, 32, 32), jnp.float32)

    logits = boringnet_forward(x, prepared)
    jax.block_until_ready(logits)

    # Sanity check against plain-JAX f32 reference (bf16 compute => looser tol).
    w1, b1, w2, b2, w3, b3 = params
    xf = x.reshape(x.shape[0], -1)
    ref = jnp.maximum(xf @ w1.T + b1, 0.0)
    ref = jnp.maximum(ref @ w2.T + b2, 0.0)
    ref = ref @ w3.T + b3

    assert logits.shape == (2, 10)
    assert jnp.allclose(logits, ref, atol=3e-2, rtol=3e-2), (
        f"max abs err {jnp.max(jnp.abs(logits - ref))}")

    print("KERNEL_OK")
</pallas_src>

<mosaic_0001>
module attributes {stable_mosaic.version = 11 : i64} {
  func.func @boringnet_kernel(%arg0: i32, %arg1: memref<16x3072xf32, #tpu.memory_space<vmem>>, %arg2: memref<3072x128xbf16, #tpu.memory_space<vmem>>, %arg3: memref<1x128xf32, #tpu.memory_space<vmem>>, %arg4: memref<128x128xbf16, #tpu.memory_space<vmem>>, %arg5: memref<1x128xf32, #tpu.memory_space<vmem>>, %arg6: memref<128x128xbf16, #tpu.memory_space<vmem>>, %arg7: memref<1x128xf32, #tpu.memory_space<vmem>>, %arg8: memref<16x128xbf16, #tpu.memory_space<vmem>>) attributes {dimension_semantics = [#tpu.dimension_semantics<parallel>], iteration_bounds = array<i64: 1>, scalar_prefetch = 0 : i64, scratch_operands = 0 : i64, tpu.core_type = #tpu.core_type<tc>, window_params = [{transform_indices = @transform_0, window_bounds = array<i64: 16, 3072>}, {pipeline_mode = #tpu.pipeline_mode<synchronous>, transform_indices = @transform_1, window_bounds = array<i64: 3072, 128>}, {pipeline_mode = #tpu.pipeline_mode<synchronous>, transform_indices = @transform_2, window_bounds = array<i64: 1, 128>}, {pipeline_mode = #tpu.pipeline_mode<synchronous>, transform_indices = @transform_3, window_bounds = array<i64: 128, 128>}, {pipeline_mode = #tpu.pipeline_mode<synchronous>, transform_indices = @transform_4, window_bounds = array<i64: 1, 128>}, {pipeline_mode = #tpu.pipeline_mode<synchronous>, transform_indices = @transform_5, window_bounds = array<i64: 128, 128>}, {pipeline_mode = #tpu.pipeline_mode<synchronous>, transform_indices = @transform_6, window_bounds = array<i64: 1, 128>}, {transform_indices = @transform_7, window_bounds = array<i64: 16, 128>}]} {
    %c0 = arith.constant 0 : index
    %c0_0 = arith.constant 0 : index
    %0 = vector.load %arg1[%c0, %c0_0] : memref<16x3072xf32, #tpu.memory_space<vmem>>, vector<16x3072xf32>
    %1 = arith.truncf %0 : vector<16x3072xf32> to vector<16x3072xbf16>
    %c0_1 = arith.constant 0 : index
    %c0_2 = arith.constant 0 : index
    %2 = vector.load %arg2[%c0_1, %c0_2] : memref<3072x128xbf16, #tpu.memory_space<vmem>>, vector<3072x128xbf16>
    %cst = arith.constant dense<0.000000e+00> : vector<16x128xf32>
    %3 = tpu.matmul %1, %2, %cst {dimension_numbers = #tpu.dot_dimension_numbers<[1], [0], [0], [1], [0, 0, 1, 1], [], []>} : vector<16x3072xbf16>, vector<3072x128xbf16>, vector<16x128xf32> -> vector<16x128xf32>
    %c0_3 = arith.constant 0 : index
    %c0_4 = arith.constant 0 : index
    %4 = vector.load %arg3[%c0_3, %c0_4] : memref<1x128xf32, #tpu.memory_space<vmem>>, vector<1x128xf32>
    %5 = vector.broadcast %4 : vector<1x128xf32> to vector<16x128xf32>
    %6 = arith.addf %3, %5 : vector<16x128xf32>
    %cst_5 = arith.constant 0.000000e+00 : f32
    %7 = vector.broadcast %cst_5 : f32 to vector<16x128xf32>
    %8 = arith.maximumf %6, %7 : vector<16x128xf32>
    %9 = arith.truncf %8 : vector<16x128xf32> to vector<16x128xbf16>
    %c0_6 = arith.constant 0 : index
    %c0_7 = arith.constant 0 : index
    %10 = vector.load %arg4[%c0_6, %c0_7] : memref<128x128xbf16, #tpu.memory_space<vmem>>, vector<128x128xbf16>
    %cst_8 = arith.constant dense<0.000000e+00> : vector<16x128xf32>
    %11 = tpu.matmul %9, %10, %cst_8 {dimension_numbers = #tpu.dot_dimension_numbers<[1], [0], [0], [1], [0, 0, 1, 1], [], []>} : vector<16x128xbf16>, vector<128x128xbf16>, vector<16x128xf32> -> vector<16x128xf32>
    %c0_9 = arith.constant 0 : index
    %c0_10 = arith.constant 0 : index
    %12 = vector.load %arg5[%c0_9, %c0_10] : memref<1x128xf32, #tpu.memory_space<vmem>>, vector<1x128xf32>
    %13 = vector.broadcast %12 : vector<1x128xf32> to vector<16x128xf32>
    %14 = arith.addf %11, %13 : vector<16x128xf32>
    %cst_11 = arith.constant 0.000000e+00 : f32
    %15 = vector.broadcast %cst_11 : f32 to vector<16x128xf32>
    %16 = arith.maximumf %14, %15 : vector<16x128xf32>
    %17 = arith.truncf %16 : vector<16x128xf32> to vector<16x128xbf16>
    %c0_12 = arith.constant 0 : index
    %c0_13 = arith.constant 0 : index
    %18 = vector.load %arg6[%c0_12, %c0_13] : memref<128x128xbf16, #tpu.memory_space<vmem>>, vector<128x128xbf16>
    %cst_14 = arith.constant dense<0.000000e+00> : vector<16x128xf32>
    %19 = tpu.matmul %17, %18, %cst_14 {dimension_numbers = #tpu.dot_dimension_numbers<[1], [0], [0], [1], [0, 0, 1, 1], [], []>} : vector<16x128xbf16>, vector<128x128xbf16>, vector<16x128xf32> -> vector<16x128xf32>
    %c0_15 = arith.constant 0 : index
    %c0_16 = arith.constant 0 : index
    %20 = vector.load %arg7[%c0_15, %c0_16] : memref<1x128xf32, #tpu.memory_space<vmem>>, vector<1x128xf32>
    %21 = vector.broadcast %20 : vector<1x128xf32> to vector<16x128xf32>
    %22 = arith.addf %19, %21 : vector<16x128xf32>
    %23 = arith.truncf %22 : vector<16x128xf32> to vector<16x128xbf16>
    %c0_17 = arith.constant 0 : index
    %c0_18 = arith.constant 0 : index
    %24 = vector.load %arg8[%c0_17, %c0_18] : memref<16x128xbf16, #tpu.memory_space<vmem>>, vector<16x128xbf16>
    tpu.vector_store %arg8[%c0_17, %c0_18], %23 {strides = array<i32>} : memref<16x128xbf16, #tpu.memory_space<vmem>>, vector<16x128xbf16>,
    return
  }
  func.func @transform_0(%arg0: i32) -> (i32, i32) {
    %c0_i32 = arith.constant 0 : i32
    %c0_i32_0 = arith.constant 0 : i32
    return %arg0, %c0_i32 : i32, i32
  }
  func.func @transform_1(%arg0: i32) -> (i32, i32) {
    %c0_i32 = arith.constant 0 : i32
    %c0_i32_0 = arith.constant 0 : i32
    %c0_i32_1 = arith.constant 0 : i32
    return %c0_i32, %c0_i32_0 : i32, i32
  }
  func.func @transform_2(%arg0: i32) -> (i32, i32) {
    %c0_i32 = arith.constant 0 : i32
    %c0_i32_0 = arith.constant 0 : i32
    %c0_i32_1 = arith.constant 0 : i32
    return %c0_i32, %c0_i32_0 : i32, i32
  }
  func.func @transform_3(%arg0: i32) -> (i32, i32) {
    %c0_i32 = arith.constant 0 : i32
    %c0_i32_0 = arith.constant 0 : i32
    %c0_i32_1 = arith.constant 0 : i32
    return %c0_i32, %c0_i32_0 : i32, i32
  }
  func.func @transform_4(%arg0: i32) -> (i32, i32) {
    %c0_i32 = arith.constant 0 : i32
    %c0_i32_0 = arith.constant 0 : i32
    %c0_i32_1 = arith.constant 0 : i32
    return %c0_i32, %c0_i32_0 : i32, i32
  }
  func.func @transform_5(%arg0: i32) -> (i32, i32) {
    %c0_i32 = arith.constant 0 : i32
    %c0_i32_0 = arith.constant 0 : i32
    %c0_i32_1 = arith.constant 0 : i32
    return %c0_i32, %c0_i32_0 : i32, i32
  }
  func.func @transform_6(%arg0: i32) -> (i32, i32) {
    %c0_i32 = arith.constant 0 : i32
    %c0_i32_0 = arith.constant 0 : i32
    %c0_i32_1 = arith.constant 0 : i32
    return %c0_i32, %c0_i32_0 : i32, i32
  }
  func.func @transform_7(%arg0: i32) -> (i32, i32) {
    %c0_i32 = arith.constant 0 : i32
    %c0_i32_0 = arith.constant 0 : i32
    return %arg0, %c0_i32 : i32, i32
  }
}

</mosaic_0001>

<llo_original>
// kernel: tpu_custom_call.1
$region0: #{tpu_custom_call.1}
  #allocation0 [shape = 'u32[]', space=smem, size = 0x4, offset = 0x4, fixed_abs, tag = 'smem constant byte address 0x4 - core index']
  #allocation1 [shape = 'u32[72,128]{1,0:T(1,128)}', space=vmem, size = 0x9000, scoped, tag = 'internal scratch']
  %s0 = inlined_call_operand.hbm [shape: f32[2,3072], index: 0, kind: input, shape index: {}]
  %s1 = inlined_call_operand.hbm [shape: bf16[3072,128], index: 1, kind: input, shape index: {}]
  %s2 = inlined_call_operand.vmem [shape: f32[1,128], index: 2, kind: input, shape index: {}]
  %s3 = inlined_call_operand.hbm [shape: bf16[128,128], index: 3, kind: input, shape index: {}]
  %s4 = inlined_call_operand.vmem [shape: f32[1,128], index: 4, kind: input, shape index: {}]
  %s5 = inlined_call_operand.hbm [shape: bf16[128,128], index: 5, kind: input, shape index: {}]
  %s6 = inlined_call_operand.vmem [shape: f32[1,128], index: 6, kind: input, shape index: {}]
  %s7 = inlined_call_operand.hbm [shape: bf16[2,128], index: 7, kind: output, shape index: {}]
  %s8 = sld [smem:[#allocation0]]
  $region54: #{tpu_custom_call.1} parent=0
    _
  %s10 = ssub.s32 1, %s8
  %s11 = scalar_select 0, %s10, %s8
  $region1: #{tpu_custom_call.1} parent=0
    #allocation2 [shape = 'u8[196608]{0}', space=vmem, size = 0x30000, scoped, tag = 'input window, operand 0, single buffered']
    #allocation3 [shape = 's32[1]{0}', space=sflag, size = 0x4, scoped, tag = 'scoped memory for tpu_custom_call.1']
    #allocation4 [shape = 's32[1]{0}', space=sflag, size = 0x4, scoped, tag = 'scoped memory for tpu_custom_call.1']
    #allocation5 [shape = 'u8[786432]{0}', space=vmem, size = 0xc0000, scoped, tag = 'input window, operand 1, single buffered']
    #allocation6 [shape = 's32[1]{0}', space=sflag, size = 0x4, scoped, tag = 'scoped memory for tpu_custom_call.1']
    #allocation7 [shape = 'u8[32768]{0}', space=vmem, size = 0x8000, scoped, tag = 'input window, operand 3, single buffered']
    #allocation8 [shape = 'u8[32768]{0}', space=vmem, size = 0x8000, scoped, tag = 'input window, operand 5, single buffered']
    #allocation9 [shape = 's32[1]{0}', space=sflag, size = 0x4, scoped, tag = 'scoped memory for tpu_custom_call.1']
    #allocation10 [shape = 'u8[4096]{0}', space=vmem, size = 0x1000, scoped, tag = 'output window, operand 0, single buffered']
    %12 = vsyncpa [#allocation3], 0
    %13 = vsyncpa [#allocation6], 0
    %14 = vsyncpa [#allocation9], 0
    %15 = vsyncpa [#allocation4], 0
    // Predicated region
    $region2: #{tpu_custom_call.1} parent=1 // pred_check
      _
    $region3: #{tpu_custom_call.1} parent=1 // pred_check_branch
      %17 = sbr.rel (0) target = $region5
    $region4: #{tpu_custom_call.1} parent=1 // pred_region
      %19 = vsyncadd [#allocation3], 5376
      %s20 = sshll.u32 %s0, 4
      %s21 = int_to_ptr.hbm [resolvable:$true] %s20
      %s22 = sshll.u32 [#allocation2], 4
      %s23 = int_to_ptr.vmem [resolvable:$true] %s22
      %28 = dma.hbm_to_vmem [thread:$0]  %s21, 768, %s23, [#allocation3], 768, 768, 48
    $region5: #{tpu_custom_call.1} parent=1 // pred_fallthru
      _
    // Predicated region
    $region6: #{tpu_custom_call.1} parent=1 // pred_check
      _
    $region7: #{tpu_custom_call.1} parent=1 // pred_check_branch
      %30 = sbr.rel (0) target = $region9
    $region8: #{tpu_custom_call.1} parent=1 // pred_region
      %32 = vsyncadd [#allocation6], 0
      %s33 = sshll.u32 %s1, 4
      %s34 = int_to_ptr.hbm [resolvable:$true] %s33
      %s35 = sshll.u32 [#allocation5], 4
      %s36 = int_to_ptr.vmem [resolvable:$true] %s35
      %41 = dma.hbm_to_vmem [thread:$0]  %s34, 24576, %s36, [#allocation6], 64, 64, 4
    $region9: #{tpu_custom_call.1} parent=1 // pred_fallthru
      _
    // Predicated region
    $region10: #{tpu_custom_call.1} parent=1 // pred_check
      _
    $region11: #{tpu_custom_call.1} parent=1 // pred_check_branch
      %43 = sbr.rel (0) target = $region13
    $region12: #{tpu_custom_call.1} parent=1 // pred_region
      _
    $region13: #{tpu_custom_call.1} parent=1 // pred_fallthru
      _
    // Predicated region
    $region14: #{tpu_custom_call.1} parent=1 // pred_check
      _
    $region15: #{tpu_custom_call.1} parent=1 // pred_check_branch
      %45 = sbr.rel (0) target = $region17
    $region16: #{tpu_custom_call.1} parent=1 // pred_region
      %47 = vsyncadd [#allocation6], 0
      %s48 = sshll.u32 %s3, 4
      %s49 = int_to_ptr.hbm [resolvable:$true] %s48
      %s50 = sshll.u32 [#allocation7], 4
      %s51 = int_to_ptr.vmem [resolvable:$true] %s50
      %56 = dma.hbm_to_vmem [thread:$0]  %s49, 1024, %s51, [#allocation6], 64, 64, 4
    $region17: #{tpu_custom_call.1} parent=1 // pred_fallthru
      _
    // Predicated region
    $region18: #{tpu_custom_call.1} parent=1 // pred_check
      _
    $region19: #{tpu_custom_call.1} parent=1 // pred_check_branch
      %58 = sbr.rel (0) target = $region21
    $region20: #{tpu_custom_call.1} parent=1 // pred_region
      _
    $region21: #{tpu_custom_call.1} parent=1 // pred_fallthru
      _
    // Predicated region
    $region22: #{tpu_custom_call.1} parent=1 // pred_check
      _
    $region23: #{tpu_custom_call.1} parent=1 // pred_check_branch
      %60 = sbr.rel (0) target = $region25
    $region24: #{tpu_custom_call.1} parent=1 // pred_region
      %62 = vsyncadd [#allocation9], 0
      %s63 = sshll.u32 %s5, 4
      %s64 = int_to_ptr.hbm [resolvable:$true] %s63
      %s65 = sshll.u32 [#allocation8], 4
      %s66 = int_to_ptr.vmem [resolvable:$true] %s65
      %71 = dma.hbm_to_vmem [thread:$0]  %s64, 1024, %s66, [#allocation9], 64, 64, 4
    $region25: #{tpu_custom_call.1} parent=1 // pred_fallthru
      _
    // Predicated region
    $region26: #{tpu_custom_call.1} parent=1 // pred_check
      _
    $region27: #{tpu_custom_call.1} parent=1 // pred_check_branch
      %73 = sbr.rel (0) target = $region29
    $region28: #{tpu_custom_call.1} parent=1 // pred_region
      _
    $region29: #{tpu_custom_call.1} parent=1 // pred_fallthru
      _
    // Predicated region
    $region30: #{tpu_custom_call.1} parent=1 // pred_check
      _
    $region31: #{tpu_custom_call.1} parent=1 // pred_check_branch
      %75 = sbr.rel (0) target = $region33
    $region32: #{tpu_custom_call.1} parent=1 // pred_region
      %77 = dma.done [#allocation3], 6144
    $region33: #{tpu_custom_call.1} parent=1 // pred_fallthru
      _
    // Predicated region
    $region34: #{tpu_custom_call.1} parent=1 // pred_check
      _
    $region35: #{tpu_custom_call.1} parent=1 // pred_check_branch
      %79 = sbr.rel (0) target = $region37
    $region36: #{tpu_custom_call.1} parent=1 // pred_region
      %81 = dma.done [#allocation6], 24576
    $region37: #{tpu_custom_call.1} parent=1 // pred_fallthru
      _
    // Predicated region
    $region38: #{tpu_custom_call.1} parent=1 // pred_check
      _
    $region39: #{tpu_custom_call.1} parent=1 // pred_check_branch
      %83 = sbr.rel (0) target = $region41
    $region40: #{tpu_custom_call.1} parent=1 // pred_region
      %85 = dma.done [#allocation6], 1024
    $region41: #{tpu_custom_call.1} parent=1 // pred_fallthru
      _
    // Predicated region
    $region42: #{tpu_custom_call.1} parent=1 // pred_check
      _
    $region43: #{tpu_custom_call.1} parent=1 // pred_check_branch
      %87 = sbr.rel (0) target = $region45
    $region44: #{tpu_custom_call.1} parent=1 // pred_region
      %89 = dma.done [#allocation9], 1024
    $region45: #{tpu_custom_call.1} parent=1 // pred_fallthru
      _
    %v90 = vld [vmem:[#allocation2] sm:$0xff]
    %v91 = vld [vmem:[#allocation2 + $0x8] sm:$0xff]
    %v92 = vld [vmem:[#allocation2 + $0x10] sm:$0xff]
    %v93 = vld [vmem:[#allocation2 + $0x18] sm:$0xff]
    %v94 = vld [vmem:[#allocation2 + $0x20] sm:$0xff]
    %v95 = vld [vmem:[#allocation2 + $0x28] sm:$0xff]
    %v96 = vld [vmem:[#allocation2 + $0x30] sm:$0xff]
    %v97 = vld [vmem:[#allocation2 + $0x38] sm:$0xff]
    %v98 = vld [vmem:[#allocation2 + $0x40] sm:$0xff]
    %v99 = vld [vmem:[#allocation2 + $0x48] sm:$0xff]
    %v100 = vld [vmem:[#allocation2 + $0x50] sm:$0xff]
    %v101 = vld [vmem:[#allocation2 + $0x58] sm:$0xff]
    %v102 = vld [vmem:[#allocation2 + $0x60] sm:$0xff]
    %v103 = vld [vmem:[#allocation2 + $0x68] sm:$0xff]
    %v104 = vld [vmem:[#allocation2 + $0x70] sm:$0xff]
    %v105 = vld [vmem:[#allocation2 + $0x78] sm:$0xff]
    %v106 = vld [vmem:[#allocation2 + $0x80] sm:$0xff]
    %v107 = vld [vmem:[#allocation2 + $0x88] sm:$0xff]
    %v108 = vld [vmem:[#allocation2 + $0x90] sm:$0xff]
    %v109 = vld [vmem:[#allocation2 + $0x98] sm:$0xff]
    %v110 = vld [vmem:[#allocation2 + $0xa0] sm:$0xff]
    %v111 = vld [vmem:[#allocation2 + $0xa8] sm:$0xff]
    %v112 = vld [vmem:[#allocation2 + $0xb0] sm:$0xff]
    %v113 = vld [vmem:[#allocation2 + $0xb8] sm:$0xff]
    %v114 = vld [vmem:[#allocation2 + $0xc0] sm:$0xff]
    %v115 = vld [vmem:[#allocation2 + $0xc8] sm:$0xff]
    %v116 = vld [vmem:[#allocation2 + $0xd0] sm:$0xff]
    %v117 = vld [vmem:[#allocation2 + $0xd8] sm:$0xff]
    %v118 = vld [vmem:[#allocation2 + $0xe0] sm:$0xff]
    %v119 = vld [vmem:[#allocation2 + $0xe8] sm:$0xff]
    %v120 = vld [vmem:[#allocation2 + $0xf0] sm:$0xff]
    %v121 = vld [vmem:[#allocation2 + $0xf8] sm:$0xff]
    %v122 = vld [vmem:[#allocation2 + $0x100] sm:$0xff]
    %v123 = vld [vmem:[#allocation2 + $0x108] sm:$0xff]
    %v124 = vld [vmem:[#allocation2 + $0x110] sm:$0xff]
    %v125 = vld [vmem:[#allocation2 + $0x118] sm:$0xff]
    %v126 = vld [vmem:[#allocation2 + $0x120] sm:$0xff]
    %v127 = vld [vmem:[#allocation2 + $0x128] sm:$0xff]
    %v128 = vld [vmem:[#allocation2 + $0x130] sm:$0xff]
    %v129 = vld [vmem:[#allocation2 + $0x138] sm:$0xff]
    %v130 = vld [vmem:[#allocation2 + $0x140] sm:$0xff]
    %v131 = vld [vmem:[#allocation2 + $0x148] sm:$0xff]
    %v132 = vld [vmem:[#allocation2 + $0x150] sm:$0xff]
    %v133 = vld [vmem:[#allocation2 + $0x158] sm:$0xff]
    %v134 = vld [vmem:[#allocation2 + $0x160] sm:$0xff]
    %v135 = vld [vmem:[#allocation2 + $0x168] sm:$0xff]
    %v136 = vld [vmem:[#allocation2 + $0x170] sm:$0xff]
    %v137 = vld [vmem:[#allocation2 + $0x178] sm:$0xff]
    %186 = vst [vmem:[#allocation1] ss:$4 sm:$0xff] %v90
    %s187 = scalar_lea.vmem [#allocation1], 1
    %188 = vst [vmem:[%s187] ss:$4 sm:$0xff] %v96
    %s189 = scalar_lea.vmem [#allocation1], 2
    %190 = vst [vmem:[%s189] ss:$4 sm:$0xff] %v102
    %s191 = scalar_lea.vmem [#allocation1], 3
    %192 = vst [vmem:[%s191] ss:$4 sm:$0xff] %v108
    %s193 = scalar_lea.vmem [#allocation1], 32
    %194 = vst [vmem:[%s193] ss:$4 sm:$0xff] %v91
    %s195 = scalar_lea.vmem [#allocation1], 33
    %196 = vst [vmem:[%s195] ss:$4 sm:$0xff] %v97
    %s197 = scalar_lea.vmem [#allocation1], 34
    %198 = vst [vmem:[%s197] ss:$4 sm:$0xff] %v103
    %s199 = scalar_lea.vmem [#allocation1], 35
    %200 = vst [vmem:[%s199] ss:$4 sm:$0xff] %v109
    %v201 = vld.sshfl [vmem:[#allocation1] sm:$0xff pattern:$0x73625140]
    %v202 = vld.sshfl [vmem:[#allocation1 + $0x8] sm:$0xff pattern:$0x73625140]
    %v203 = vld.sshfl [vmem:[#allocation1 + $0x10] sm:$0xff pattern:$0x73625140]
    %v204 = vld.sshfl [vmem:[#allocation1 + $0x18] sm:$0xff pattern:$0x73625140]
    %v205 = vld.sshfl [vmem:[#allocation1 + $0x20] sm:$0xff pattern:$0x73625140]
    %v206 = vld.sshfl [vmem:[#allocation1 + $0x28] sm:$0xff pattern:$0x73625140]
    %v207 = vld.sshfl [vmem:[#allocation1 + $0x30] sm:$0xff pattern:$0x73625140]
    %v208 = vld.sshfl [vmem:[#allocation1 + $0x38] sm:$0xff pattern:$0x73625140]
    %209 = vst [vmem:[#allocation1] ss:$4 sm:$0xff] %v92
    %210 = vst [vmem:[%s187] ss:$4 sm:$0xff] %v98
    %211 = vst [vmem:[%s189] ss:$4 sm:$0xff] %v104
    %212 = vst [vmem:[%s191] ss:$4 sm:$0xff] %v110
    %213 = vst [vmem:[%s193] ss:$4 sm:$0xff] %v93
    %214 = vst [vmem:[%s195] ss:$4 sm:$0xff] %v99
    %215 = vst [vmem:[%s197] ss:$4 sm:$0xff] %v105
    %216 = vst [vmem:[%s199] ss:$4 sm:$0xff] %v111
    %v217 = vld.sshfl [vmem:[#allocation1] sm:$0xff pattern:$0x73625140]
    %v218 = vld.sshfl [vmem:[#allocation1 + $0x8] sm:$0xff pattern:$0x73625140]
    %v219 = vld.sshfl [vmem:[#allocation1 + $0x10] sm:$0xff pattern:$0x73625140]
    %v220 = vld.sshfl [vmem:[#allocation1 + $0x18] sm:$0xff pattern:$0x73625140]
    %v221 = vld.sshfl [vmem:[#allocation1 + $0x20] sm:$0xff pattern:$0x73625140]
    %v222 = vld.sshfl [vmem:[#allocation1 + $0x28] sm:$0xff pattern:$0x73625140]
    %v223 = vld.sshfl [vmem:[#allocation1 + $0x30] sm:$0xff pattern:$0x73625140]
    %v224 = vld.sshfl [vmem:[#allocation1 + $0x38] sm:$0xff pattern:$0x73625140]
    %225 = vst [vmem:[#allocation1] ss:$4 sm:$0xff] %v94
    %226 = vst [vmem:[%s187] ss:$4 sm:$0xff] %v100
    %227 = vst [vmem:[%s189] ss:$4 sm:$0xff] %v106
    %228 = vst [vmem:[%s191] ss:$4 sm:$0xff] %v112
    %229 = vst [vmem:[%s193] ss:$4 sm:$0xff] %v95
    %230 = vst [vmem:[%s195] ss:$4 sm:$0xff] %v101
    %231 = vst [vmem:[%s197] ss:$4 sm:$0xff] %v107
    %232 = vst [vmem:[%s199] ss:$4 sm:$0xff] %v113
    %v233 = vld.sshfl [vmem:[#allocation1] sm:$0xff pattern:$0x73625140]
    %v234 = vld.sshfl [vmem:[#allocation1 + $0x8] sm:$0xff pattern:$0x73625140]
    %v235 = vld.sshfl [vmem:[#allocation1 + $0x10] sm:$0xff pattern:$0x73625140]
    %v236 = vld.sshfl [vmem:[#allocation1 + $0x18] sm:$0xff pattern:$0x73625140]
    %v237 = vld.sshfl [vmem:[#allocation1 + $0x20] sm:$0xff pattern:$0x73625140]
    %v238 = vld.sshfl [vmem:[#allocation1 + $0x28] sm:$0xff pattern:$0x73625140]
    %v239 = vld.sshfl [vmem:[#allocation1 + $0x30] sm:$0xff pattern:$0x73625140]
    %v240 = vld.sshfl [vmem:[#allocation1 + $0x38] sm:$0xff pattern:$0x73625140]
    %241 = vst [vmem:[#allocation1] ss:$4 sm:$0xff] %v114
    %242 = vst [vmem:[%s187] ss:$4 sm:$0xff] %v120
    %243 = vst [vmem:[%s189] ss:$4 sm:$0xff] %v126
    %244 = vst [vmem:[%s191] ss:$4 sm:$0xff] %v132
    %245 = vst [vmem:[%s193] ss:$4 sm:$0xff] %v115
    %246 = vst [vmem:[%s195] ss:$4 sm:$0xff] %v121
    %247 = vst [vmem:[%s197] ss:$4 sm:$0xff] %v127
    %248 = vst [vmem:[%s199] ss:$4 sm:$0xff] %v133
    %v249 = vld.sshfl [vmem:[#allocation1] sm:$0xff pattern:$0x73625140]
    %v250 = vld.sshfl [vmem:[#allocation1 + $0x8] sm:$0xff pattern:$0x73625140]
    %v251 = vld.sshfl [vmem:[#allocation1 + $0x10] sm:$0xff pattern:$0x73625140]
    %v252 = vld.sshfl [vmem:[#allocation1 + $0x18] sm:$0xff pattern:$0x73625140]
    %v253 = vld.sshfl [vmem:[#allocation1 + $0x20] sm:$0xff pattern:$0x73625140]
    %v254 = vld.sshfl [vmem:[#allocation1 + $0x28] sm:$0xff pattern:$0x73625140]
    %v255 = vld.sshfl [vmem:[#allocation1 + $0x30] sm:$0xff pattern:$0x73625140]
    %v256 = vld.sshfl [vmem:[#allocation1 + $0x38] sm:$0xff pattern:$0x73625140]
    %257 = vst [vmem:[#allocation1] ss:$4 sm:$0xff] %v116
    %258 = vst [vmem:[%s187] ss:$4 sm:$0xff] %v122
    %259 = vst [vmem:[%s189] ss:$4 sm:$0xff] %v128
    %260 = vst [vmem:[%s191] ss:$4 sm:$0xff] %v134
    %261 = vst [vmem:[%s193] ss:$4 sm:$0xff] %v117
    %262 = vst [vmem:[%s195] ss:$4 sm:$0xff] %v123
    %263 = vst [vmem:[%s197] ss:$4 sm:$0xff] %v129
    %264 = vst [vmem:[%s199] ss:$4 sm:$0xff] %v135
    %v265 = vld.sshfl [vmem:[#allocation1] sm:$0xff pattern:$0x73625140]
    %v266 = vld.sshfl [vmem:[#allocation1 + $0x8] sm:$0xff pattern:$0x73625140]
    %v267 = vld.sshfl [vmem:[#allocation1 + $0x10] sm:$0xff pattern:$0x73625140]
    %v268 = vld.sshfl [vmem:[#allocation1 + $0x18] sm:$0xff pattern:$0x73625140]
    %v269 = vld.sshfl [vmem:[#allocation1 + $0x20] sm:$0xff pattern:$0x73625140]
    %v270 = vld.sshfl [vmem:[#allocation1 + $0x28] sm:$0xff pattern:$0x73625140]
    %v271 = vld.sshfl [vmem:[#allocation1 + $0x30] sm:$0xff pattern:$0x73625140]
    %v272 = vld.sshfl [vmem:[#allocation1 + $0x38] sm:$0xff pattern:$0x73625140]
    %273 = vst [vmem:[#allocation1] ss:$4 sm:$0xff] %v118
    %274 = vst [vmem:[%s187] ss:$4 sm:$0xff] %v124
    %275 = vst [vmem:[%s189] ss:$4 sm:$0xff] %v130
    %276 = vst [vmem:[%s191] ss:$4 sm:$0xff] %v136
    %277 = vst [vmem:[%s193] ss:$4 sm:$0xff] %v119
    %278 = vst [vmem:[%s195] ss:$4 sm:$0xff] %v125
    %279 = vst [vmem:[%s197] ss:$4 sm:$0xff] %v131
    %280 = vst [vmem:[%s199] ss:$4 sm:$0xff] %v137
    %v281 = vld.sshfl [vmem:[#allocation1] sm:$0xff pattern:$0x73625140]
    %v282 = vld.sshfl [vmem:[#allocation1 + $0x8] sm:$0xff pattern:$0x73625140]
    %v283 = vld.sshfl [vmem:[#allocation1 + $0x10] sm:$0xff pattern:$0x73625140]
    %v284 = vld.sshfl [vmem:[#allocation1 + $0x18] sm:$0xff pattern:$0x73625140]
    %v285 = vld.sshfl [vmem:[#allocation1 + $0x20] sm:$0xff pattern:$0x73625140]
    %v286 = vld.sshfl [vmem:[#allocation1 + $0x28] sm:$0xff pattern:$0x73625140]
    %v287 = vld.sshfl [vmem:[#allocation1 + $0x30] sm:$0xff pattern:$0x73625140]
    %v288 = vld.sshfl [vmem:[#allocation1 + $0x38] sm:$0xff pattern:$0x73625140]
    %v337 = vpack.c.bf16 %v249, %v201
    %v338 = vpack.c.bf16 %v250, %v202
    %v339 = vpack.c.bf16 %v251, %v203
    %v340 = vpack.c.bf16 %v252, %v204
    %v341 = vpack.c.bf16 %v253, %v205
    %v342 = vpack.c.bf16 %v254, %v206
    %v343 = vpack.c.bf16 %v255, %v207
    %v344 = vpack.c.bf16 %v256, %v208
    %v345 = vpack.c.bf16 %v265, %v217
    %v346 = vpack.c.bf16 %v266, %v218
    %v347 = vpack.c.bf16 %v267, %v219
    %v348 = vpack.c.bf16 %v268, %v220
    %v349 = vpack.c.bf16 %v269, %v221
    %v350 = vpack.c.bf16 %v270, %v222
    %v351 = vpack.c.bf16 %v271, %v223
    %v352 = vpack.c.bf16 %v272, %v224
    %v353 = vpack.c.bf16 %v281, %v233
    %v354 = vpack.c.bf16 %v282, %v234
    %v355 = vpack.c.bf16 %v283, %v235
    %v356 = vpack.c.bf16 %v284, %v236
    %v357 = vpack.c.bf16 %v285, %v237
    %v358 = vpack.c.bf16 %v286, %v238
    %v359 = vpack.c.bf16 %v287, %v239
    %v360 = vpack.c.bf16 %v288, %v240
    %v361 = vld [vmem:[#allocation5] sm:$0xf]
    %v362 = vld [vmem:[#allocation5 + $0x4] sm:$0xf]
    %v363 = vld [vmem:[#allocation5 + $0x8] sm:$0xf]
    %v364 = vld [vmem:[#allocation5 + $0xc] sm:$0xf]
    %v365 = vld [vmem:[#allocation5 + $0x10] sm:$0xf]
    %v366 = vld [vmem:[#allocation5 + $0x14] sm:$0xf]
    %v367 = vld [vmem:[#allocation5 + $0x18] sm:$0xf]
    %v368 = vld [vmem:[#allocation5 + $0x1c] sm:$0xf]
    %v369 = vld [vmem:[#allocation5 + $0x20] sm:$0xf]
    %v370 = vld [vmem:[#allocation5 + $0x24] sm:$0xf]
    %v371 = vld [vmem:[#allocation5 + $0x28] sm:$0xf]
    %v372 = vld [vmem:[#allocation5 + $0x2c] sm:$0xf]
    %v373 = vld [vmem:[#allocation5 + $0x30] sm:$0xf]
    %v374 = vld [vmem:[#allocation5 + $0x34] sm:$0xf]
    %v375 = vld [vmem:[#allocation5 + $0x38] sm:$0xf]
    %v376 = vld [vmem:[#allocation5 + $0x3c] sm:$0xf]
    %v377 = vld [vmem:[#allocation5 + $0x40] sm:$0xf]
    %v378 = vld [vmem:[#allocation5 + $0x44] sm:$0xf]
    %v379 = vld [vmem:[#allocation5 + $0x48] sm:$0xf]
    %v380 = vld [vmem:[#allocation5 + $0x4c] sm:$0xf]
    %v381 = vld [vmem:[#allocation5 + $0x50] sm:$0xf]
    %v382 = vld [vmem:[#allocation5 + $0x54] sm:$0xf]
    %v383 = vld [vmem:[#allocation5 + $0x58] sm:$0xf]
    %v384 = vld [vmem:[#allocation5 + $0x5c] sm:$0xf]
    %v385 = vld [vmem:[#allocation5 + $0x60] sm:$0xf]
    %v386 = vld [vmem:[#allocation5 + $0x64] sm:$0xf]
    %v387 = vld [vmem:[#allocation5 + $0x68] sm:$0xf]
    %v388 = vld [vmem:[#allocation5 + $0x6c] sm:$0xf]
    %v389 = vld [vmem:[#allocation5 + $0x70] sm:$0xf]
    %v390 = vld [vmem:[#allocation5 + $0x74] sm:$0xf]
    %v391 = vld [vmem:[#allocation5 + $0x78] sm:$0xf]
    %v392 = vld [vmem:[#allocation5 + $0x7c] sm:$0xf]
    %v393 = vld [vmem:[#allocation5 + $0x80] sm:$0xf]
    %v394 = vld [vmem:[#allocation5 + $0x84] sm:$0xf]
    %v395 = vld [vmem:[#allocation5 + $0x88] sm:$0xf]
    %v396 = vld [vmem:[#allocation5 + $0x8c] sm:$0xf]
    %v397 = vld [vmem:[#allocation5 + $0x90] sm:$0xf]
    %v398 = vld [vmem:[#allocation5 + $0x94] sm:$0xf]
    %v399 = vld [vmem:[#allocation5 + $0x98] sm:$0xf]
    %v400 = vld [vmem:[#allocation5 + $0x9c] sm:$0xf]
    %v401 = vld [vmem:[#allocation5 + $0xa0] sm:$0xf]
    %v402 = vld [vmem:[#allocation5 + $0xa4] sm:$0xf]
    %v403 = vld [vmem:[#allocation5 + $0xa8] sm:$0xf]
    %v404 = vld [vmem:[#allocation5 + $0xac] sm:$0xf]
    %v405 = vld [vmem:[#allocation5 + $0xb0] sm:$0xf]
    %v406 = vld [vmem:[#allocation5 + $0xb4] sm:$0xf]
    %v407 = vld [vmem:[#allocation5 + $0xb8] sm:$0xf]
    %v408 = vld [vmem:[#allocation5 + $0xbc] sm:$0xf]
    %v409 = vld [vmem:[#allocation5 + $0xc0] sm:$0xf]
    %v410 = vld [vmem:[#allocation5 + $0xc4] sm:$0xf]
    %v411 = vld [vmem:[#allocation5 + $0xc8] sm:$0xf]
    %v412 = vld [vmem:[#allocation5 + $0xcc] sm:$0xf]
    %v413 = vld [vmem:[#allocation5 + $0xd0] sm:$0xf]
    %v414 = vld [vmem:[#allocation5 + $0xd4] sm:$0xf]
    %v415 = vld [vmem:[#allocation5 + $0xd8] sm:$0xf]
    %v416 = vld [vmem:[#allocation5 + $0xdc] sm:$0xf]
    %v417 = vld [vmem:[#allocation5 + $0xe0] sm:$0xf]
    %v418 = vld [vmem:[#allocation5 + $0xe4] sm:$0xf]
    %v419 = vld [vmem:[#allocation5 + $0xe8] sm:$0xf]
    %v420 = vld [vmem:[#allocation5 + $0xec] sm:$0xf]
    %v421 = vld [vmem:[#allocation5 + $0xf0] sm:$0xf]
    %v422 = vld [vmem:[#allocation5 + $0xf4] sm:$0xf]
    %v423 = vld [vmem:[#allocation5 + $0xf8] sm:$0xf]
    %v424 = vld [vmem:[#allocation5 + $0xfc] sm:$0xf]
    %v425 = vld [vmem:[#allocation5 + $0x100] sm:$0xf]
    %v426 = vld [vmem:[#allocation5 + $0x104] sm:$0xf]
    %v427 = vld [vmem:[#allocation5 + $0x108] sm:$0xf]
    %v428 = vld [vmem:[#allocation5 + $0x10c] sm:$0xf]
    %v429 = vld [vmem:[#allocation5 + $0x110] sm:$0xf]
    %v430 = vld [vmem:[#allocation5 + $0x114] sm:$0xf]
    %v431 = vld [vmem:[#allocation5 + $0x118] sm:$0xf]
    %v432 = vld [vmem:[#allocation5 + $0x11c] sm:$0xf]
    %v433 = vld [vmem:[#allocation5 + $0x120] sm:$0xf]
    %v434 = vld [vmem:[#allocation5 + $0x124] sm:$0xf]
    %v435 = vld [vmem:[#allocation5 + $0x128] sm:$0xf]
    %v436 = vld [vmem:[#allocation5 + $0x12c] sm:$0xf]
    %v437 = vld [vmem:[#allocation5 + $0x130] sm:$0xf]
    %v438 = vld [vmem:[#allocation5 + $0x134] sm:$0xf]
    %v439 = vld [vmem:[#allocation5 + $0x138] sm:$0xf]
    %v440 = vld [vmem:[#allocation5 + $0x13c] sm:$0xf]
    %v441 = vld [vmem:[#allocation5 + $0x140] sm:$0xf]
    %v442 = vld [vmem:[#allocation5 + $0x144] sm:$0xf]
    %v443 = vld [vmem:[#allocation5 + $0x148] sm:$0xf]
    %v444 = vld [vmem:[#allocation5 + $0x14c] sm:$0xf]
    %v445 = vld [vmem:[#allocation5 + $0x150] sm:$0xf]
    %v446 = vld [vmem:[#allocation5 + $0x154] sm:$0xf]
    %v447 = vld [vmem:[#allocation5 + $0x158] sm:$0xf]
    %v448 = vld [vmem:[#allocation5 + $0x15c] sm:$0xf]
    %v449 = vld [vmem:[#allocation5 + $0x160] sm:$0xf]
    %v450 = vld [vmem:[#allocation5 + $0x164] sm:$0xf]
    %v451 = vld [vmem:[#allocation5 + $0x168] sm:$0xf]
    %v452 = vld [vmem:[#allocation5 + $0x16c] sm:$0xf]
    %v453 = vld [vmem:[#allocation5 + $0x170] sm:$0xf]
    %v454 = vld [vmem:[#allocation5 + $0x174] sm:$0xf]
    %v455 = vld [vmem:[#allocation5 + $0x178] sm:$0xf]
    %v456 = vld [vmem:[#allocation5 + $0x17c] sm:$0xf]
    %v457 = vld [vmem:[#allocation5 + $0x180] sm:$0xf]
    %v458 = vld [vmem:[#allocation5 + $0x184] sm:$0xf]
    %v459 = vld [vmem:[#allocation5 + $0x188] sm:$0xf]
    %v460 = vld [vmem:[#allocation5 + $0x18c] sm:$0xf]
    %v461 = vld [vmem:[#allocation5 + $0x190] sm:$0xf]
    %v462 = vld [vmem:[#allocation5 + $0x194] sm:$0xf]
    %v463 = vld [vmem:[#allocation5 + $0x198] sm:$0xf]
    %v464 = vld [vmem:[#allocation5 + $0x19c] sm:$0xf]
    %v465 = vld [vmem:[#allocation5 + $0x1a0] sm:$0xf]
    %v466 = vld [vmem:[#allocation5 + $0x1a4] sm:$0xf]
    %v467 = vld [vmem:[#allocation5 + $0x1a8] sm:$0xf]
    %v468 = vld [vmem:[#allocation5 + $0x1ac] sm:$0xf]
    %v469 = vld [vmem:[#allocation5 + $0x1b0] sm:$0xf]
    %v470 = vld [vmem:[#allocation5 + $0x1b4] sm:$0xf]
    %v471 = vld [vmem:[#allocation5 + $0x1b8] sm:$0xf]
    %v472 = vld [vmem:[#allocation5 + $0x1bc] sm:$0xf]
    %v473 = vld [vmem:[#allocation5 + $0x1c0] sm:$0xf]
    %v474 = vld [vmem:[#allocation5 + $0x1c4] sm:$0xf]
    %v475 = vld [vmem:[#allocation5 + $0x1c8] sm:$0xf]
    %v476 = vld [vmem:[#allocation5 + $0x1cc] sm:$0xf]
    %v477 = vld [vmem:[#allocation5 + $0x1d0] sm:$0xf]
    %v478 = vld [vmem:[#allocation5 + $0x1d4] sm:$0xf]
    %v479 = vld [vmem:[#allocation5 + $0x1d8] sm:$0xf]
    %v480 = vld [vmem:[#allocation5 + $0x1dc] sm:$0xf]
    %v481 = vld [vmem:[#allocation5 + $0x1e0] sm:$0xf]
    %v482 = vld [vmem:[#allocation5 + $0x1e4] sm:$0xf]
    %v483 = vld [vmem:[#allocation5 + $0x1e8] sm:$0xf]
    %v484 = vld [vmem:[#allocation5 + $0x1ec] sm:$0xf]
    %v485 = vld [vmem:[#allocation5 + $0x1f0] sm:$0xf]
    %v486 = vld [vmem:[#allocation5 + $0x1f4] sm:$0xf]
    %v487 = vld [vmem:[#allocation5 + $0x1f8] sm:$0xf]
    %v488 = vld [vmem:[#allocation5 + $0x1fc] sm:$0xf]
    %v489 = vld [vmem:[#allocation5 + $0x200] sm:$0xf]
    %v490 = vld [vmem:[#allocation5 + $0x204] sm:$0xf]
    %v491 = vld [vmem:[#allocation5 + $0x208] sm:$0xf]
    %v492 = vld [vmem:[#allocation5 + $0x20c] sm:$0xf]
    %v493 = vld [vmem:[#allocation5 + $0x210] sm:$0xf]
    %v494 = vld [vmem:[#allocation5 + $0x214] sm:$0xf]
    %v495 = vld [vmem:[#allocation5 + $0x218] sm:$0xf]
    %v496 = vld [vmem:[#allocation5 + $0x21c] sm:$0xf]
    %v497 = vld [vmem:[#allocation5 + $0x220] sm:$0xf]
    %v498 = vld [vmem:[#allocation5 + $0x224] sm:$0xf]
    %v499 = vld [vmem:[#allocation5 + $0x228] sm:$0xf]
    %v500 = vld [vmem:[#allocation5 + $0x22c] sm:$0xf]
    %v501 = vld [vmem:[#allocation5 + $0x230] sm:$0xf]
    %v502 = vld [vmem:[#allocation5 + $0x234] sm:$0xf]
    %v503 = vld [vmem:[#allocation5 + $0x238] sm:$0xf]
    %v504 = vld [vmem:[#allocation5 + $0x23c] sm:$0xf]
    %v505 = vld [vmem:[#allocation5 + $0x240] sm:$0xf]
    %v506 = vld [vmem:[#allocation5 + $0x244] sm:$0xf]
    %v507 = vld [vmem:[#allocation5 + $0x248] sm:$0xf]
    %v508 = vld [vmem:[#allocation5 + $0x24c] sm:$0xf]
    %v509 = vld [vmem:[#allocation5 + $0x250] sm:$0xf]
    %v510 = vld [vmem:[#allocation5 + $0x254] sm:$0xf]
    %v511 = vld [vmem:[#allocation5 + $0x258] sm:$0xf]
    %v512 = vld [vmem:[#allocation5 + $0x25c] sm:$0xf]
    %v513 = vld [vmem:[#allocation5 + $0x260] sm:$0xf]
    %v514 = vld [vmem:[#allocation5 + $0x264] sm:$0xf]
    %v515 = vld [vmem:[#allocation5 + $0x268] sm:$0xf]
    %v516 = vld [vmem:[#allocation5 + $0x26c] sm:$0xf]
    %v517 = vld [vmem:[#allocation5 + $0x270] sm:$0xf]
    %v518 = vld [vmem:[#allocation5 + $0x274] sm:$0xf]
    %v519 = vld [vmem:[#allocation5 + $0x278] sm:$0xf]
    %v520 = vld [vmem:[#allocation5 + $0x27c] sm:$0xf]
    %v521 = vld [vmem:[#allocation5 + $0x280] sm:$0xf]
    %v522 = vld [vmem:[#allocation5 + $0x284] sm:$0xf]
    %v523 = vld [vmem:[#allocation5 + $0x288] sm:$0xf]
    %v524 = vld [vmem:[#allocation5 + $0x28c] sm:$0xf]
    %v525 = vld [vmem:[#allocation5 + $0x290] sm:$0xf]
    %v526 = vld [vmem:[#allocation5 + $0x294] sm:$0xf]
    %v527 = vld [vmem:[#allocation5 + $0x298] sm:$0xf]
    %v528 = vld [vmem:[#allocation5 + $0x29c] sm:$0xf]
    %v529 = vld [vmem:[#allocation5 + $0x2a0] sm:$0xf]
    %v530 = vld [vmem:[#allocation5 + $0x2a4] sm:$0xf]
    %v531 = vld [vmem:[#allocation5 + $0x2a8] sm:$0xf]
    %v532 = vld [vmem:[#allocation5 + $0x2ac] sm:$0xf]
    %v533 = vld [vmem:[#allocation5 + $0x2b0] sm:$0xf]
    %v534 = vld [vmem:[#allocation5 + $0x2b4] sm:$0xf]
    %v535 = vld [vmem:[#allocation5 + $0x2b8] sm:$0xf]
    %v536 = vld [vmem:[#allocation5 + $0x2bc] sm:$0xf]
    %v537 = vld [vmem:[#allocation5 + $0x2c0] sm:$0xf]
    %v538 = vld [vmem:[#allocation5 + $0x2c4] sm:$0xf]
    %v539 = vld [vmem:[#allocation5 + $0x2c8] sm:$0xf]
    %v540 = vld [vmem:[#allocation5 + $0x2cc] sm:$0xf]
    %v541 = vld [vmem:[#allocation5 + $0x2d0] sm:$0xf]
    %v542 = vld [vmem:[#allocation5 + $0x2d4] sm:$0xf]
    %v543 = vld [vmem:[#allocation5 + $0x2d8] sm:$0xf]
    %v544 = vld [vmem:[#allocation5 + $0x2dc] sm:$0xf]
    %v545 = vld [vmem:[#allocation5 + $0x2e0] sm:$0xf]
    %v546 = vld [vmem:[#allocation5 + $0x2e4] sm:$0xf]
    %v547 = vld [vmem:[#allocation5 + $0x2e8] sm:$0xf]
    %v548 = vld [vmem:[#allocation5 + $0x2ec] sm:$0xf]
    %v549 = vld [vmem:[#allocation5 + $0x2f0] sm:$0xf]
    %v550 = vld [vmem:[#allocation5 + $0x2f4] sm:$0xf]
    %v551 = vld [vmem:[#allocation5 + $0x2f8] sm:$0xf]
    %v552 = vld [vmem:[#allocation5 + $0x2fc] sm:$0xf]
    %v553 = vld [vmem:[#allocation5 + $0x300] sm:$0xf]
    %v554 = vld [vmem:[#allocation5 + $0x304] sm:$0xf]
    %v555 = vld [vmem:[#allocation5 + $0x308] sm:$0xf]
    %v556 = vld [vmem:[#allocation5 + $0x30c] sm:$0xf]
    %v557 = vld [vmem:[#allocation5 + $0x310] sm:$0xf]
    %v558 = vld [vmem:[#allocation5 + $0x314] sm:$0xf]
    %v559 = vld [vmem:[#allocation5 + $0x318] sm:$0xf]
    %v560 = vld [vmem:[#allocation5 + $0x31c] sm:$0xf]
    %v561 = vld [vmem:[#allocation5 + $0x320] sm:$0xf]
    %v562 = vld [vmem:[#allocation5 + $0x324] sm:$0xf]
    %v563 = vld [vmem:[#allocation5 + $0x328] sm:$0xf]
    %v564 = vld [vmem:[#allocation5 + $0x32c] sm:$0xf]
    %v565 = vld [vmem:[#allocation5 + $0x330] sm:$0xf]
    %v566 = vld [vmem:[#allocation5 + $0x334] sm:$0xf]
    %v567 = vld [vmem:[#allocation5 + $0x338] sm:$0xf]
    %v568 = vld [vmem:[#allocation5 + $0x33c] sm:$0xf]
    %v569 = vld [vmem:[#allocation5 + $0x340] sm:$0xf]
    %v570 = vld [vmem:[#allocation5 + $0x344] sm:$0xf]
    %v571 = vld [vmem:[#allocation5 + $0x348] sm:$0xf]
    %v572 = vld [vmem:[#allocation5 + $0x34c] sm:$0xf]
    %v573 = vld [vmem:[#allocation5 + $0x350] sm:$0xf]
    %v574 = vld [vmem:[#allocation5 + $0x354] sm:$0xf]
    %v575 = vld [vmem:[#allocation5 + $0x358] sm:$0xf]
    %v576 = vld [vmem:[#allocation5 + $0x35c] sm:$0xf]
    %v577 = vld [vmem:[#allocation5 + $0x360] sm:$0xf]
    %v578 = vld [vmem:[#allocation5 + $0x364] sm:$0xf]
    %v579 = vld [vmem:[#allocation5 + $0x368] sm:$0xf]
    %v580 = vld [vmem:[#allocation5 + $0x36c] sm:$0xf]
    %v581 = vld [vmem:[#allocation5 + $0x370] sm:$0xf]
    %v582 = vld [vmem:[#allocation5 + $0x374] sm:$0xf]
    %v583 = vld [vmem:[#allocation5 + $0x378] sm:$0xf]
    %v584 = vld [vmem:[#allocation5 + $0x37c] sm:$0xf]
    %v585 = vld [vmem:[#allocation5 + $0x380] sm:$0xf]
    %v586 = vld [vmem:[#allocation5 + $0x384] sm:$0xf]
    %v587 = vld [vmem:[#allocation5 + $0x388] sm:$0xf]
    %v588 = vld [vmem:[#allocation5 + $0x38c] sm:$0xf]
    %v589 = vld [vmem:[#allocation5 + $0x390] sm:$0xf]
    %v590 = vld [vmem:[#allocation5 + $0x394] sm:$0xf]
    %v591 = vld [vmem:[#allocation5 + $0x398] sm:$0xf]
    %v592 = vld [vmem:[#allocation5 + $0x39c] sm:$0xf]
    %v593 = vld [vmem:[#allocation5 + $0x3a0] sm:$0xf]
    %v594 = vld [vmem:[#allocation5 + $0x3a4] sm:$0xf]
    %v595 = vld [vmem:[#allocation5 + $0x3a8] sm:$0xf]
    %v596 = vld [vmem:[#allocation5 + $0x3ac] sm:$0xf]
    %v597 = vld [vmem:[#allocation5 + $0x3b0] sm:$0xf]
    %v598 = vld [vmem:[#allocation5 + $0x3b4] sm:$0xf]
    %v599 = vld [vmem:[#allocation5 + $0x3b8] sm:$0xf]
    %v600 = vld [vmem:[#allocation5 + $0x3bc] sm:$0xf]
    %v601 = vld [vmem:[#allocation5 + $0x3c0] sm:$0xf]
    %v602 = vld [vmem:[#allocation5 + $0x3c4] sm:$0xf]
    %v603 = vld [vmem:[#allocation5 + $0x3c8] sm:$0xf]
    %v604 = vld [vmem:[#allocation5 + $0x3cc] sm:$0xf]
    %v605 = vld [vmem:[#allocation5 + $0x3d0] sm:$0xf]
    %v606 = vld [vmem:[#allocation5 + $0x3d4] sm:$0xf]
    %v607 = vld [vmem:[#allocation5 + $0x3d8] sm:$0xf]
    %v608 = vld [vmem:[#allocation5 + $0x3dc] sm:$0xf]
    %v609 = vld [vmem:[#allocation5 + $0x3e0] sm:$0xf]
    %v610 = vld [vmem:[#allocation5 + $0x3e4] sm:$0xf]
    %v611 = vld [vmem:[#allocation5 + $0x3e8] sm:$0xf]
    %v612 = vld [vmem:[#allocation5 + $0x3ec] sm:$0xf]
    %v613 = vld [vmem:[#allocation5 + $0x3f0] sm:$0xf]
    %v614 = vld [vmem:[#allocation5 + $0x3f4] sm:$0xf]
    %v615 = vld [vmem:[#allocation5 + $0x3f8] sm:$0xf]
    %v616 = vld [vmem:[#allocation5 + $0x3fc] sm:$0xf]
    %v617 = vld [vmem:[#allocation5 + $0x400] sm:$0xf]
    %v618 = vld [vmem:[#allocation5 + $0x404] sm:$0xf]
    %v619 = vld [vmem:[#allocation5 + $0x408] sm:$0xf]
    %v620 = vld [vmem:[#allocation5 + $0x40c] sm:$0xf]
    %v621 = vld [vmem:[#allocation5 + $0x410] sm:$0xf]
    %v622 = vld [vmem:[#allocation5 + $0x414] sm:$0xf]
    %v623 = vld [vmem:[#allocation5 + $0x418] sm:$0xf]
    %v624 = vld [vmem:[#allocation5 + $0x41c] sm:$0xf]
    %v625 = vld [vmem:[#allocation5 + $0x420] sm:$0xf]
    %v626 = vld [vmem:[#allocation5 + $0x424] sm:$0xf]
    %v627 = vld [vmem:[#allocation5 + $0x428] sm:$0xf]
    %v628 = vld [vmem:[#allocation5 + $0x42c] sm:$0xf]
    %v629 = vld [vmem:[#allocation5 + $0x430] sm:$0xf]
    %v630 = vld [vmem:[#allocation5 + $0x434] sm:$0xf]
    %v631 = vld [vmem:[#allocation5 + $0x438] sm:$0xf]
    %v632 = vld [vmem:[#allocation5 + $0x43c] sm:$0xf]
    %v633 = vld [vmem:[#allocation5 + $0x440] sm:$0xf]
    %v634 = vld [vmem:[#allocation5 + $0x444] sm:$0xf]
    %v635 = vld [vmem:[#allocation5 + $0x448] sm:$0xf]
    %v636 = vld [vmem:[#allocation5 + $0x44c] sm:$0xf]
    %v637 = vld [vmem:[#allocation5 + $0x450] sm:$0xf]
    %v638 = vld [vmem:[#allocation5 + $0x454] sm:$0xf]
    %v639 = vld [vmem:[#allocation5 + $0x458] sm:$0xf]
    %v640 = vld [vmem:[#allocation5 + $0x45c] sm:$0xf]
    %v641 = vld [vmem:[#allocation5 + $0x460] sm:$0xf]
    %v642 = vld [vmem:[#allocation5 + $0x464] sm:$0xf]
    %v643 = vld [vmem:[#allocation5 + $0x468] sm:$0xf]
    %v644 = vld [vmem:[#allocation5 + $0x46c] sm:$0xf]
    %v645 = vld [vmem:[#allocation5 + $0x470] sm:$0xf]
    %v646 = vld [vmem:[#allocation5 + $0x474] sm:$0xf]
    %v647 = vld [vmem:[#allocation5 + $0x478] sm:$0xf]
    %v648 = vld [vmem:[#allocation5 + $0x47c] sm:$0xf]
    %v649 = vld [vmem:[#allocation5 + $0x480] sm:$0xf]
    %v650 = vld [vmem:[#allocation5 + $0x484] sm:$0xf]
    %v651 = vld [vmem:[#allocation5 + $0x488] sm:$0xf]
    %v652 = vld [vmem:[#allocation5 + $0x48c] sm:$0xf]
    %v653 = vld [vmem:[#allocation5 + $0x490] sm:$0xf]
    %v654 = vld [vmem:[#allocation5 + $0x494] sm:$0xf]
    %v655 = vld [vmem:[#allocation5 + $0x498] sm:$0xf]
    %v656 = vld [vmem:[#allocation5 + $0x49c] sm:$0xf]
    %v657 = vld [vmem:[#allocation5 + $0x4a0] sm:$0xf]
    %v658 = vld [vmem:[#allocation5 + $0x4a4] sm:$0xf]
    %v659 = vld [vmem:[#allocation5 + $0x4a8] sm:$0xf]
    %v660 = vld [vmem:[#allocation5 + $0x4ac] sm:$0xf]
    %v661 = vld [vmem:[#allocation5 + $0x4b0] sm:$0xf]
    %v662 = vld [vmem:[#allocation5 + $0x4b4] sm:$0xf]
    %v663 = vld [vmem:[#allocation5 + $0x4b8] sm:$0xf]
    %v664 = vld [vmem:[#allocation5 + $0x4bc] sm:$0xf]
    %v665 = vld [vmem:[#allocation5 + $0x4c0] sm:$0xf]
    %v666 = vld [vmem:[#allocation5 + $0x4c4] sm:$0xf]
    %v667 = vld [vmem:[#allocation5 + $0x4c8] sm:$0xf]
    %v668 = vld [vmem:[#allocation5 + $0x4cc] sm:$0xf]
    %v669 = vld [vmem:[#allocation5 + $0x4d0] sm:$0xf]
    %v670 = vld [vmem:[#allocation5 + $0x4d4] sm:$0xf]
    %v671 = vld [vmem:[#allocation5 + $0x4d8] sm:$0xf]
    %v672 = vld [vmem:[#allocation5 + $0x4dc] sm:$0xf]
    %v673 = vld [vmem:[#allocation5 + $0x4e0] sm:$0xf]
    %v674 = vld [vmem:[#allocation5 + $0x4e4] sm:$0xf]
    %v675 = vld [vmem:[#allocation5 + $0x4e8] sm:$0xf]
    %v676 = vld [vmem:[#allocation5 + $0x4ec] sm:$0xf]
    %v677 = vld [vmem:[#allocation5 + $0x4f0] sm:$0xf]
    %v678 = vld [vmem:[#allocation5 + $0x4f4] sm:$0xf]
    %v679 = vld [vmem:[#allocation5 + $0x4f8] sm:$0xf]
    %v680 = vld [vmem:[#allocation5 + $0x4fc] sm:$0xf]
    %v681 = vld [vmem:[#allocation5 + $0x500] sm:$0xf]
    %v682 = vld [vmem:[#allocation5 + $0x504] sm:$0xf]
    %v683 = vld [vmem:[#allocation5 + $0x508] sm:$0xf]
    %v684 = vld [vmem:[#allocation5 + $0x50c] sm:$0xf]
    %v685 = vld [vmem:[#allocation5 + $0x510] sm:$0xf]
    %v686 = vld [vmem:[#allocation5 + $0x514] sm:$0xf]
    %v687 = vld [vmem:[#allocation5 + $0x518] sm:$0xf]
    %v688 = vld [vmem:[#allocation5 + $0x51c] sm:$0xf]
    %v689 = vld [vmem:[#allocation5 + $0x520] sm:$0xf]
    %v690 = vld [vmem:[#allocation5 + $0x524] sm:$0xf]
    %v691 = vld [vmem:[#allocation5 + $0x528] sm:$0xf]
    %v692 = vld [vmem:[#allocation5 + $0x52c] sm:$0xf]
    %v693 = vld [vmem:[#allocation5 + $0x530] sm:$0xf]
    %v694 = vld [vmem:[#allocation5 + $0x534] sm:$0xf]
    %v695 = vld [vmem:[#allocation5 + $0x538] sm:$0xf]
    %v696 = vld [vmem:[#allocation5 + $0x53c] sm:$0xf]
    %v697 = vld [vmem:[#allocation5 + $0x540] sm:$0xf]
    %v698 = vld [vmem:[#allocation5 + $0x544] sm:$0xf]
    %v699 = vld [vmem:[#allocation5 + $0x548] sm:$0xf]
    %v700 = vld [vmem:[#allocation5 + $0x54c] sm:$0xf]
    %v701 = vld [vmem:[#allocation5 + $0x550] sm:$0xf]
    %v702 = vld [vmem:[#allocation5 + $0x554] sm:$0xf]
    %v703 = vld [vmem:[#allocation5 + $0x558] sm:$0xf]
    %v704 = vld [vmem:[#allocation5 + $0x55c] sm:$0xf]
    %v705 = vld [vmem:[#allocation5 + $0x560] sm:$0xf]
    %v706 = vld [vmem:[#allocation5 + $0x564] sm:$0xf]
    %v707 = vld [vmem:[#allocation5 + $0x568] sm:$0xf]
    %v708 = vld [vmem:[#allocation5 + $0x56c] sm:$0xf]
    %v709 = vld [vmem:[#allocation5 + $0x570] sm:$0xf]
    %v710 = vld [vmem:[#allocation5 + $0x574] sm:$0xf]
    %v711 = vld [vmem:[#allocation5 + $0x578] sm:$0xf]
    %v712 = vld [vmem:[#allocation5 + $0x57c] sm:$0xf]
    %v713 = vld [vmem:[#allocation5 + $0x580] sm:$0xf]
    %v714 = vld [vmem:[#allocation5 + $0x584] sm:$0xf]
    %v715 = vld [vmem:[#allocation5 + $0x588] sm:$0xf]
    %v716 = vld [vmem:[#allocation5 + $0x58c] sm:$0xf]
    %v717 = vld [vmem:[#allocation5 + $0x590] sm:$0xf]
    %v718 = vld [vmem:[#allocation5 + $0x594] sm:$0xf]
    %v719 = vld [vmem:[#allocation5 + $0x598] sm:$0xf]
    %v720 = vld [vmem:[#allocation5 + $0x59c] sm:$0xf]
    %v721 = vld [vmem:[#allocation5 + $0x5a0] sm:$0xf]
    %v722 = vld [vmem:[#allocation5 + $0x5a4] sm:$0xf]
    %v723 = vld [vmem:[#allocation5 + $0x5a8] sm:$0xf]
    %v724 = vld [vmem:[#allocation5 + $0x5ac] sm:$0xf]
    %v725 = vld [vmem:[#allocation5 + $0x5b0] sm:$0xf]
    %v726 = vld [vmem:[#allocation5 + $0x5b4] sm:$0xf]
    %v727 = vld [vmem:[#allocation5 + $0x5b8] sm:$0xf]
    %v728 = vld [vmem:[#allocation5 + $0x5bc] sm:$0xf]
    %v729 = vld [vmem:[#allocation5 + $0x5c0] sm:$0xf]
    %v730 = vld [vmem:[#allocation5 + $0x5c4] sm:$0xf]
    %v731 = vld [vmem:[#allocation5 + $0x5c8] sm:$0xf]
    %v732 = vld [vmem:[#allocation5 + $0x5cc] sm:$0xf]
    %v733 = vld [vmem:[#allocation5 + $0x5d0] sm:$0xf]
    %v734 = vld [vmem:[#allocation5 + $0x5d4] sm:$0xf]
    %v735 = vld [vmem:[#allocation5 + $0x5d8] sm:$0xf]
    %v736 = vld [vmem:[#allocation5 + $0x5dc] sm:$0xf]
    %v737 = vld [vmem:[#allocation5 + $0x5e0] sm:$0xf]
    %v738 = vld [vmem:[#allocation5 + $0x5e4] sm:$0xf]
    %v739 = vld [vmem:[#allocation5 + $0x5e8] sm:$0xf]
    %v740 = vld [vmem:[#allocation5 + $0x5ec] sm:$0xf]
    %v741 = vld [vmem:[#allocation5 + $0x5f0] sm:$0xf]
    %v742 = vld [vmem:[#allocation5 + $0x5f4] sm:$0xf]
    %v743 = vld [vmem:[#allocation5 + $0x5f8] sm:$0xf]
    %v744 = vld [vmem:[#allocation5 + $0x5fc] sm:$0xf]
    %v745 = vld [vmem:[%s2] sm:$0x1]
    %v747 = vperm.slane %v745, 0
    %v1133 = vunpack.c.l.b16 %v361
    %v1134 = vunpack.c.l.b16 %v362
    %v1135 = vunpack.c.l.b16 %v363
    %v1136 = vunpack.c.l.b16 %v364
    %v1137 = vunpack.c.l.b16 %v365
    %v1138 = vunpack.c.l.b16 %v366
    %v1139 = vunpack.c.l.b16 %v367
    %v1140 = vunpack.c.l.b16 %v368
    %v1141 = vunpack.c.l.b16 %v369
    %v1142 = vunpack.c.l.b16 %v370
    %v1143 = vunpack.c.l.b16 %v371
    %v1144 = vunpack.c.l.b16 %v372
    %v1145 = vunpack.c.l.b16 %v373
    %v1146 = vunpack.c.l.b16 %v374
    %v1147 = vunpack.c.l.b16 %v375
    %v1148 = vunpack.c.l.b16 %v376
    %v1149 = vunpack.c.l.b16 %v377
    %v1150 = vunpack.c.l.b16 %v378
    %v1151 = vunpack.c.l.b16 %v379
    %v1152 = vunpack.c.l.b16 %v380
    %v1153 = vunpack.c.l.b16 %v381
    %v1154 = vunpack.c.l.b16 %v382
    %v1155 = vunpack.c.l.b16 %v383
    %v1156 = vunpack.c.l.b16 %v384
    %v1157 = vunpack.c.l.b16 %v385
    %v1158 = vunpack.c.l.b16 %v386
    %v1159 = vunpack.c.l.b16 %v387
    %v1160 = vunpack.c.l.b16 %v388
    %v1161 = vunpack.c.l.b16 %v389
    %v1162 = vunpack.c.l.b16 %v390
    %v1163 = vunpack.c.l.b16 %v391
    %v1164 = vunpack.c.l.b16 %v392
    %v1165 = vunpack.c.l.b16 %v393
    %v1166 = vunpack.c.l.b16 %v394
    %v1167 = vunpack.c.l.b16 %v395
    %v1168 = vunpack.c.l.b16 %v396
    %v1169 = vunpack.c.l.b16 %v397
    %v1170 = vunpack.c.l.b16 %v398
    %v1171 = vunpack.c.l.b16 %v399
    %v1172 = vunpack.c.l.b16 %v400
    %v1173 = vunpack.c.l.b16 %v401
    %v1174 = vunpack.c.l.b16 %v402
    %v1175 = vunpack.c.l.b16 %v403
    %v1176 = vunpack.c.l.b16 %v404
    %v1177 = vunpack.c.l.b16 %v405
    %v1178 = vunpack.c.l.b16 %v406
    %v1179 = vunpack.c.l.b16 %v407
    %v1180 = vunpack.c.l.b16 %v408
    %v1181 = vunpack.c.l.b16 %v409
    %v1182 = vunpack.c.l.b16 %v410
    %v1183 = vunpack.c.l.b16 %v411
    %v1184 = vunpack.c.l.b16 %v412
    %v1185 = vunpack.c.l.b16 %v413
    %v1186 = vunpack.c.l.b16 %v414
    %v1187 = vunpack.c.l.b16 %v415
    %v1188 = vunpack.c.l.b16 %v416
    %v1189 = vunpack.c.l.b16 %v417
    %v1190 = vunpack.c.l.b16 %v418
    %v1191 = vunpack.c.l.b16 %v419
    %v1192 = vunpack.c.l.b16 %v420
    %v1193 = vunpack.c.l.b16 %v421
    %v1194 = vunpack.c.l.b16 %v422
    %v1195 = vunpack.c.l.b16 %v423
    %v1196 = vunpack.c.l.b16 %v424
    %v1197 = vunpack.c.l.b16 %v425
    %v1198 = vunpack.c.l.b16 %v426
    %v1199 = vunpack.c.l.b16 %v427
    %v1200 = vunpack.c.l.b16 %v428
    %v1201 = vunpack.c.l.b16 %v429
    %v1202 = vunpack.c.l.b16 %v430
    %v1203 = vunpack.c.l.b16 %v431
    %v1204 = vunpack.c.l.b16 %v432
    %v1205 = vunpack.c.l.b16 %v433
    %v1206 = vunpack.c.l.b16 %v434
    %v1207 = vunpack.c.l.b16 %v435
    %v1208 = vunpack.c.l.b16 %v436
    %v1209 = vunpack.c.l.b16 %v437
    %v1210 = vunpack.c.l.b16 %v438
    %v1211 = vunpack.c.l.b16 %v439
    %v1212 = vunpack.c.l.b16 %v440
    %v1213 = vunpack.c.l.b16 %v441
    %v1214 = vunpack.c.l.b16 %v442
    %v1215 = vunpack.c.l.b16 %v443
    %v1216 = vunpack.c.l.b16 %v444
    %v1217 = vunpack.c.l.b16 %v445
    %v1218 = vunpack.c.l.b16 %v446
    %v1219 = vunpack.c.l.b16 %v447
    %v1220 = vunpack.c.l.b16 %v448
    %v1221 = vunpack.c.l.b16 %v449
    %v1222 = vunpack.c.l.b16 %v450
    %v1223 = vunpack.c.l.b16 %v451
    %v1224 = vunpack.c.l.b16 %v452
    %v1225 = vunpack.c.l.b16 %v453
    %v1226 = vunpack.c.l.b16 %v454
    %v1227 = vunpack.c.l.b16 %v455
    %v1228 = vunpack.c.l.b16 %v456
    %v1229 = vunpack.c.l.b16 %v457
    %v1230 = vunpack.c.l.b16 %v458
    %v1231 = vunpack.c.l.b16 %v459
    %v1232 = vunpack.c.l.b16 %v460
    %v1233 = vunpack.c.l.b16 %v461
    %v1234 = vunpack.c.l.b16 %v462
    %v1235 = vunpack.c.l.b16 %v463
    %v1236 = vunpack.c.l.b16 %v464
    %v1237 = vunpack.c.l.b16 %v465
    %v1238 = vunpack.c.l.b16 %v466
    %v1239 = vunpack.c.l.b16 %v467
    %v1240 = vunpack.c.l.b16 %v468
    %v1241 = vunpack.c.l.b16 %v469
    %v1242 = vunpack.c.l.b16 %v470
    %v1243 = vunpack.c.l.b16 %v471
    %v1244 = vunpack.c.l.b16 %v472
    %v1245 = vunpack.c.l.b16 %v473
    %v1246 = vunpack.c.l.b16 %v474
    %v1247 = vunpack.c.l.b16 %v475
    %v1248 = vunpack.c.l.b16 %v476
    %v1249 = vunpack.c.l.b16 %v477
    %v1250 = vunpack.c.l.b16 %v478
    %v1251 = vunpack.c.l.b16 %v479
    %v1252 = vunpack.c.l.b16 %v480
    %v1253 = vunpack.c.l.b16 %v481
    %v1254 = vunpack.c.l.b16 %v482
    %v1255 = vunpack.c.l.b16 %v483
    %v1256 = vunpack.c.l.b16 %v484
    %v1257 = vunpack.c.l.b16 %v485
    %v1258 = vunpack.c.l.b16 %v486
    %v1259 = vunpack.c.l.b16 %v487
    %v1260 = vunpack.c.l.b16 %v488
    %v1261 = vunpack.c.l.b16 %v489
    %v1262 = vunpack.c.l.b16 %v490
    %v1263 = vunpack.c.l.b16 %v491
    %v1264 = vunpack.c.l.b16 %v492
    %v1265 = vunpack.c.l.b16 %v493
    %v1266 = vunpack.c.l.b16 %v494
    %v1267 = vunpack.c.l.b16 %v495
    %v1268 = vunpack.c.l.b16 %v496
    %v1269 = vunpack.c.l.b16 %v497
    %v1270 = vunpack.c.l.b16 %v498
    %v1271 = vunpack.c.l.b16 %v499
    %v1272 = vunpack.c.l.b16 %v500
    %v1273 = vunpack.c.l.b16 %v501
    %v1274 = vunpack.c.l.b16 %v502
    %v1275 = vunpack.c.l.b16 %v503
    %v1276 = vunpack.c.l.b16 %v504
    %v1277 = vunpack.c.l.b16 %v505
    %v1278 = vunpack.c.l.b16 %v506
    %v1279 = vunpack.c.l.b16 %v507
    %v1280 = vunpack.c.l.b16 %v508
    %v1281 = vunpack.c.l.b16 %v509
    %v1282 = vunpack.c.l.b16 %v510
    %v1283 = vunpack.c.l.b16 %v511
    %v1284 = vunpack.c.l.b16 %v512
    %v1285 = vunpack.c.l.b16 %v513
    %v1286 = vunpack.c.l.b16 %v514
    %v1287 = vunpack.c.l.b16 %v515
    %v1288 = vunpack.c.l.b16 %v516
    %v1289 = vunpack.c.l.b16 %v517
    %v1290 = vunpack.c.l.b16 %v518
    %v1291 = vunpack.c.l.b16 %v519
    %v1292 = vunpack.c.l.b16 %v520
    %v1293 = vunpack.c.l.b16 %v521
    %v1294 = vunpack.c.l.b16 %v522
    %v1295 = vunpack.c.l.b16 %v523
    %v1296 = vunpack.c.l.b16 %v524
    %v1297 = vunpack.c.l.b16 %v525
    %v1298 = vunpack.c.l.b16 %v526
    %v1299 = vunpack.c.l.b16 %v527
    %v1300 = vunpack.c.l.b16 %v528
    %v1301 = vunpack.c.l.b16 %v529
    %v1302 = vunpack.c.l.b16 %v530
    %v1303 = vunpack.c.l.b16 %v531
    %v1304 = vunpack.c.l.b16 %v532
    %v1305 = vunpack.c.l.b16 %v533
    %v1306 = vunpack.c.l.b16 %v534
    %v1307 = vunpack.c.l.b16 %v535
    %v1308 = vunpack.c.l.b16 %v536
    %v1309 = vunpack.c.l.b16 %v537
    %v1310 = vunpack.c.l.b16 %v538
    %v1311 = vunpack.c.l.b16 %v539
    %v1312 = vunpack.c.l.b16 %v540
    %v1313 = vunpack.c.l.b16 %v541
    %v1314 = vunpack.c.l.b16 %v542
    %v1315 = vunpack.c.l.b16 %v543
    %v1316 = vunpack.c.l.b16 %v544
    %v1317 = vunpack.c.l.b16 %v545
    %v1318 = vunpack.c.l.b16 %v546
    %v1319 = vunpack.c.l.b16 %v547
    %v1320 = vunpack.c.l.b16 %v548
    %v1321 = vunpack.c.l.b16 %v549
    %v1322 = vunpack.c.l.b16 %v550
    %v1323 = vunpack.c.l.b16 %v551
    %v1324 = vunpack.c.l.b16 %v552
    %v1325 = vunpack.c.l.b16 %v553
    %v1326 = vunpack.c.l.b16 %v554
    %v1327 = vunpack.c.l.b16 %v555
    %v1328 = vunpack.c.l.b16 %v556
    %v1329 = vunpack.c.l.b16 %v557
    %v1330 = vunpack.c.l.b16 %v558
    %v1331 = vunpack.c.l.b16 %v559
    %v1332 = vunpack.c.l.b16 %v560
    %v1333 = vunpack.c.l.b16 %v561
    %v1334 = vunpack.c.l.b16 %v562
    %v1335 = vunpack.c.l.b16 %v563
    %v1336 = vunpack.c.l.b16 %v564
    %v1337 = vunpack.c.l.b16 %v565
    %v1338 = vunpack.c.l.b16 %v566
    %v1339 = vunpack.c.l.b16 %v567
    %v1340 = vunpack.c.l.b16 %v568
    %v1341 = vunpack.c.l.b16 %v569
    %v1342 = vunpack.c.l.b16 %v570
    %v1343 = vunpack.c.l.b16 %v571
    %v1344 = vunpack.c.l.b16 %v572
    %v1345 = vunpack.c.l.b16 %v573
    %v1346 = vunpack.c.l.b16 %v574
    %v1347 = vunpack.c.l.b16 %v575
    %v1348 = vunpack.c.l.b16 %v576
    %v1349 = vunpack.c.l.b16 %v577
    %v1350 = vunpack.c.l.b16 %v578
    %v1351 = vunpack.c.l.b16 %v579
    %v1352 = vunpack.c.l.b16 %v580
    %v1353 = vunpack.c.l.b16 %v581
    %v1354 = vunpack.c.l.b16 %v582
    %v1355 = vunpack.c.l.b16 %v583
    %v1356 = vunpack.c.l.b16 %v584
    %v1357 = vunpack.c.l.b16 %v585
    %v1358 = vunpack.c.l.b16 %v586
    %v1359 = vunpack.c.l.b16 %v587
    %v1360 = vunpack.c.l.b16 %v588
    %v1361 = vunpack.c.l.b16 %v589
    %v1362 = vunpack.c.l.b16 %v590
    %v1363 = vunpack.c.l.b16 %v591
    %v1364 = vunpack.c.l.b16 %v592
    %v1365 = vunpack.c.l.b16 %v593
    %v1366 = vunpack.c.l.b16 %v594
    %v1367 = vunpack.c.l.b16 %v595
    %v1368 = vunpack.c.l.b16 %v596
    %v1369 = vunpack.c.l.b16 %v597
    %v1370 = vunpack.c.l.b16 %v598
    %v1371 = vunpack.c.l.b16 %v599
    %v1372 = vunpack.c.l.b16 %v600
    %v1373 = vunpack.c.l.b16 %v601
    %v1374 = vunpack.c.l.b16 %v602
    %v1375 = vunpack.c.l.b16 %v603
    %v1376 = vunpack.c.l.b16 %v604
    %v1377 = vunpack.c.l.b16 %v605
    %v1378 = vunpack.c.l.b16 %v606
    %v1379 = vunpack.c.l.b16 %v607
    %v1380 = vunpack.c.l.b16 %v608
    %v1381 = vunpack.c.l.b16 %v609
    %v1382 = vunpack.c.l.b16 %v610
    %v1383 = vunpack.c.l.b16 %v611
    %v1384 = vunpack.c.l.b16 %v612
    %v1385 = vunpack.c.l.b16 %v613
    %v1386 = vunpack.c.l.b16 %v614
    %v1387 = vunpack.c.l.b16 %v615
    %v1388 = vunpack.c.l.b16 %v616
    %v1389 = vunpack.c.l.b16 %v617
    %v1390 = vunpack.c.l.b16 %v618
    %v1391 = vunpack.c.l.b16 %v619
    %v1392 = vunpack.c.l.b16 %v620
    %v1393 = vunpack.c.l.b16 %v621
    %v1394 = vunpack.c.l.b16 %v622
    %v1395 = vunpack.c.l.b16 %v623
    %v1396 = vunpack.c.l.b16 %v624
    %v1397 = vunpack.c.l.b16 %v625
    %v1398 = vunpack.c.l.b16 %v626
    %v1399 = vunpack.c.l.b16 %v627
    %v1400 = vunpack.c.l.b16 %v628
    %v1401 = vunpack.c.l.b16 %v629
    %v1402 = vunpack.c.l.b16 %v630
    %v1403 = vunpack.c.l.b16 %v631
    %v1404 = vunpack.c.l.b16 %v632
    %v1405 = vunpack.c.l.b16 %v633
    %v1406 = vunpack.c.l.b16 %v634
    %v1407 = vunpack.c.l.b16 %v635
    %v1408 = vunpack.c.l.b16 %v636
    %v1409 = vunpack.c.l.b16 %v637
    %v1410 = vunpack.c.l.b16 %v638
    %v1411 = vunpack.c.l.b16 %v639
    %v1412 = vunpack.c.l.b16 %v640
    %v1413 = vunpack.c.l.b16 %v641
    %v1414 = vunpack.c.l.b16 %v642
    %v1415 = vunpack.c.l.b16 %v643
    %v1416 = vunpack.c.l.b16 %v644
    %v1417 = vunpack.c.l.b16 %v645
    %v1418 = vunpack.c.l.b16 %v646
    %v1419 = vunpack.c.l.b16 %v647
    %v1420 = vunpack.c.l.b16 %v648
    %v1421 = vunpack.c.l.b16 %v649
    %v1422 = vunpack.c.l.b16 %v650
    %v1423 = vunpack.c.l.b16 %v651
    %v1424 = vunpack.c.l.b16 %v652
    %v1425 = vunpack.c.l.b16 %v653
    %v1426 = vunpack.c.l.b16 %v654
    %v1427 = vunpack.c.l.b16 %v655
    %v1428 = vunpack.c.l.b16 %v656
    %v1429 = vunpack.c.l.b16 %v657
    %v1430 = vunpack.c.l.b16 %v658
    %v1431 = vunpack.c.l.b16 %v659
    %v1432 = vunpack.c.l.b16 %v660
    %v1433 = vunpack.c.l.b16 %v661
    %v1434 = vunpack.c.l.b16 %v662
    %v1435 = vunpack.c.l.b16 %v663
    %v1436 = vunpack.c.l.b16 %v664
    %v1437 = vunpack.c.l.b16 %v665
    %v1438 = vunpack.c.l.b16 %v666
    %v1439 = vunpack.c.l.b16 %v667
    %v1440 = vunpack.c.l.b16 %v668
    %v1441 = vunpack.c.l.b16 %v669
    %v1442 = vunpack.c.l.b16 %v670
    %v1443 = vunpack.c.l.b16 %v671
    %v1444 = vunpack.c.l.b16 %v672
    %v1445 = vunpack.c.l.b16 %v673
    %v1446 = vunpack.c.l.b16 %v674
    %v1447 = vunpack.c.l.b16 %v675
    %v1448 = vunpack.c.l.b16 %v676
    %v1449 = vunpack.c.l.b16 %v677
    %v1450 = vunpack.c.l.b16 %v678
    %v1451 = vunpack.c.l.b16 %v679
    %v1452 = vunpack.c.l.b16 %v680
    %v1453 = vunpack.c.l.b16 %v681
    %v1454 = vunpack.c.l.b16 %v682
    %v1455 = vunpack.c.l.b16 %v683
    %v1456 = vunpack.c.l.b16 %v684
    %v1457 = vunpack.c.l.b16 %v685
    %v1458 = vunpack.c.l.b16 %v686
    %v1459 = vunpack.c.l.b16 %v687
    %v1460 = vunpack.c.l.b16 %v688
    %v1461 = vunpack.c.l.b16 %v689
    %v1462 = vunpack.c.l.b16 %v690
    %v1463 = vunpack.c.l.b16 %v691
    %v1464 = vunpack.c.l.b16 %v692
    %v1465 = vunpack.c.l.b16 %v693
    %v1466 = vunpack.c.l.b16 %v694
    %v1467 = vunpack.c.l.b16 %v695
    %v1468 = vunpack.c.l.b16 %v696
    %v1469 = vunpack.c.l.b16 %v697
    %v1470 = vunpack.c.l.b16 %v698
    %v1471 = vunpack.c.l.b16 %v699
    %v1472 = vunpack.c.l.b16 %v700
    %v1473 = vunpack.c.l.b16 %v701
    %v1474 = vunpack.c.l.b16 %v702
    %v1475 = vunpack.c.l.b16 %v703
    %v1476 = vunpack.c.l.b16 %v704
    %v1477 = vunpack.c.l.b16 %v705
    %v1478 = vunpack.c.l.b16 %v706
    %v1479 = vunpack.c.l.b16 %v707
    %v1480 = vunpack.c.l.b16 %v708
    %v1481 = vunpack.c.l.b16 %v709
    %v1482 = vunpack.c.l.b16 %v710
    %v1483 = vunpack.c.l.b16 %v711
    %v1484 = vunpack.c.l.b16 %v712
    %v1485 = vunpack.c.l.b16 %v713
    %v1486 = vunpack.c.l.b16 %v714
    %v1487 = vunpack.c.l.b16 %v715
    %v1488 = vunpack.c.l.b16 %v716
    %v1489 = vunpack.c.l.b16 %v717
    %v1490 = vunpack.c.l.b16 %v718
    %v1491 = vunpack.c.l.b16 %v719
    %v1492 = vunpack.c.l.b16 %v720
    %v1493 = vunpack.c.l.b16 %v721
    %v1494 = vunpack.c.l.b16 %v722
    %v1495 = vunpack.c.l.b16 %v723
    %v1496 = vunpack.c.l.b16 %v724
    %v1497 = vunpack.c.l.b16 %v725
    %v1498 = vunpack.c.l.b16 %v726
    %v1499 = vunpack.c.l.b16 %v727
    %v1500 = vunpack.c.l.b16 %v728
    %v1501 = vunpack.c.l.b16 %v729
    %v1502 = vunpack.c.l.b16 %v730
    %v1503 = vunpack.c.l.b16 %v731
    %v1504 = vunpack.c.l.b16 %v732
    %v1505 = vunpack.c.l.b16 %v733
    %v1506 = vunpack.c.l.b16 %v734
    %v1507 = vunpack.c.l.b16 %v735
    %v1508 = vunpack.c.l.b16 %v736
    %v1509 = vunpack.c.l.b16 %v737
    %v1510 = vunpack.c.l.b16 %v738
    %v1511 = vunpack.c.l.b16 %v739
    %v1512 = vunpack.c.l.b16 %v740
    %v1513 = vunpack.c.l.b16 %v741
    %v1514 = vunpack.c.l.b16 %v742
    %v1515 = vunpack.c.l.b16 %v743
    %v1516 = vunpack.c.l.b16 %v744
    %v1517 = vpack.c.b16 %v1134, %v1133
    %v1518 = vpack.c.b16 %v1136, %v1135
    %v1519 = vpack.c.b16 %v1138, %v1137
    %v1520 = vpack.c.b16 %v1140, %v1139
    %v1521 = vpack.c.b16 %v1142, %v1141
    %v1522 = vpack.c.b16 %v1144, %v1143
    %v1523 = vpack.c.b16 %v1146, %v1145
    %v1524 = vpack.c.b16 %v1148, %v1147
    %v1525 = vpack.c.b16 %v1150, %v1149
    %v1526 = vpack.c.b16 %v1152, %v1151
    %v1527 = vpack.c.b16 %v1154, %v1153
    %v1528 = vpack.c.b16 %v1156, %v1155
    %v1529 = vpack.c.b16 %v1158, %v1157
    %v1530 = vpack.c.b16 %v1160, %v1159
    %v1531 = vpack.c.b16 %v1162, %v1161
    %v1532 = vpack.c.b16 %v1164, %v1163
    %v1533 = vpack.c.b16 %v1166, %v1165
    %v1534 = vpack.c.b16 %v1168, %v1167
    %v1535 = vpack.c.b16 %v1170, %v1169
    %v1536 = vpack.c.b16 %v1172, %v1171
    %v1537 = vpack.c.b16 %v1174, %v1173
    %v1538 = vpack.c.b16 %v1176, %v1175
    %v1539 = vpack.c.b16 %v1178, %v1177
    %v1540 = vpack.c.b16 %v1180, %v1179
    %v1541 = vpack.c.b16 %v1182, %v1181
    %v1542 = vpack.c.b16 %v1184, %v1183
    %v1543 = vpack.c.b16 %v1186, %v1185
    %v1544 = vpack.c.b16 %v1188, %v1187
    %v1545 = vpack.c.b16 %v1190, %v1189
    %v1546 = vpack.c.b16 %v1192, %v1191
    %v1547 = vpack.c.b16 %v1194, %v1193
    %v1548 = vpack.c.b16 %v1196, %v1195
    %v1549 = vpack.c.b16 %v1198, %v1197
    %v1550 = vpack.c.b16 %v1200, %v1199
    %v1551 = vpack.c.b16 %v1202, %v1201
    %v1552 = vpack.c.b16 %v1204, %v1203
    %v1553 = vpack.c.b16 %v1206, %v1205
    %v1554 = vpack.c.b16 %v1208, %v1207
    %v1555 = vpack.c.b16 %v1210, %v1209
    %v1556 = vpack.c.b16 %v1212, %v1211
    %v1557 = vpack.c.b16 %v1214, %v1213
    %v1558 = vpack.c.b16 %v1216, %v1215
    %v1559 = vpack.c.b16 %v1218, %v1217
    %v1560 = vpack.c.b16 %v1220, %v1219
    %v1561 = vpack.c.b16 %v1222, %v1221
    %v1562 = vpack.c.b16 %v1224, %v1223
    %v1563 = vpack.c.b16 %v1226, %v1225
    %v1564 = vpack.c.b16 %v1228, %v1227
    %v1565 = vpack.c.b16 %v1230, %v1229
    %v1566 = vpack.c.b16 %v1232, %v1231
    %v1567 = vpack.c.b16 %v1234, %v1233
    %v1568 = vpack.c.b16 %v1236, %v1235
    %v1569 = vpack.c.b16 %v1238, %v1237
    %v1570 = vpack.c.b16 %v1240, %v1239
    %v1571 = vpack.c.b16 %v1242, %v1241
    %v1572 = vpack.c.b16 %v1244, %v1243
    %v1573 = vpack.c.b16 %v1246, %v1245
    %v1574 = vpack.c.b16 %v1248, %v1247
    %v1575 = vpack.c.b16 %v1250, %v1249
    %v1576 = vpack.c.b16 %v1252, %v1251
    %v1577 = vpack.c.b16 %v1254, %v1253
    %v1578 = vpack.c.b16 %v1256, %v1255
    %v1579 = vpack.c.b16 %v1258, %v1257
    %v1580 = vpack.c.b16 %v1260, %v1259
    %v1581 = vpack.c.b16 %v1262, %v1261
    %v1582 = vpack.c.b16 %v1264, %v1263
    %v1583 = vpack.c.b16 %v1266, %v1265
    %v1584 = vpack.c.b16 %v1268, %v1267
    %v1585 = vpack.c.b16 %v1270, %v1269
    %v1586 = vpack.c.b16 %v1272, %v1271
    %v1587 = vpack.c.b16 %v1274, %v1273
    %v1588 = vpack.c.b16 %v1276, %v1275
    %v1589 = vpack.c.b16 %v1278, %v1277
    %v1590 = vpack.c.b16 %v1280, %v1279
    %v1591 = vpack.c.b16 %v1282, %v1281
    %v1592 = vpack.c.b16 %v1284, %v1283
    %v1593 = vpack.c.b16 %v1286, %v1285
    %v1594 = vpack.c.b16 %v1288, %v1287
    %v1595 = vpack.c.b16 %v1290, %v1289
    %v1596 = vpack.c.b16 %v1292, %v1291
    %v1597 = vpack.c.b16 %v1294, %v1293
    %v1598 = vpack.c.b16 %v1296, %v1295
    %v1599 = vpack.c.b16 %v1298, %v1297
    %v1600 = vpack.c.b16 %v1300, %v1299
    %v1601 = vpack.c.b16 %v1302, %v1301
    %v1602 = vpack.c.b16 %v1304, %v1303
    %v1603 = vpack.c.b16 %v1306, %v1305
    %v1604 = vpack.c.b16 %v1308, %v1307
    %v1605 = vpack.c.b16 %v1310, %v1309
    %v1606 = vpack.c.b16 %v1312, %v1311
    %v1607 = vpack.c.b16 %v1314, %v1313
    %v1608 = vpack.c.b16 %v1316, %v1315
    %v1609 = vpack.c.b16 %v1318, %v1317
    %v1610 = vpack.c.b16 %v1320, %v1319
    %v1611 = vpack.c.b16 %v1322, %v1321
    %v1612 = vpack.c.b16 %v1324, %v1323
    %v1613 = vpack.c.b16 %v1326, %v1325
    %v1614 = vpack.c.b16 %v1328, %v1327
    %v1615 = vpack.c.b16 %v1330, %v1329
    %v1616 = vpack.c.b16 %v1332, %v1331
    %v1617 = vpack.c.b16 %v1334, %v1333
    %v1618 = vpack.c.b16 %v1336, %v1335
    %v1619 = vpack.c.b16 %v1338, %v1337
    %v1620 = vpack.c.b16 %v1340, %v1339
    %v1621 = vpack.c.b16 %v1342, %v1341
    %v1622 = vpack.c.b16 %v1344, %v1343
    %v1623 = vpack.c.b16 %v1346, %v1345
    %v1624 = vpack.c.b16 %v1348, %v1347
    %v1625 = vpack.c.b16 %v1350, %v1349
    %v1626 = vpack.c.b16 %v1352, %v1351
    %v1627 = vpack.c.b16 %v1354, %v1353
    %v1628 = vpack.c.b16 %v1356, %v1355
    %v1629 = vpack.c.b16 %v1358, %v1357
    %v1630 = vpack.c.b16 %v1360, %v1359
    %v1631 = vpack.c.b16 %v1362, %v1361
    %v1632 = vpack.c.b16 %v1364, %v1363
    %v1633 = vpack.c.b16 %v1366, %v1365
    %v1634 = vpack.c.b16 %v1368, %v1367
    %v1635 = vpack.c.b16 %v1370, %v1369
    %v1636 = vpack.c.b16 %v1372, %v1371
    %v1637 = vpack.c.b16 %v1374, %v1373
    %v1638 = vpack.c.b16 %v1376, %v1375
    %v1639 = vpack.c.b16 %v1378, %v1377
    %v1640 = vpack.c.b16 %v1380, %v1379
    %v1641 = vpack.c.b16 %v1382, %v1381
    %v1642 = vpack.c.b16 %v1384, %v1383
    %v1643 = vpack.c.b16 %v1386, %v1385
    %v1644 = vpack.c.b16 %v1388, %v1387
    %v1645 = vpack.c.b16 %v1390, %v1389
    %v1646 = vpack.c.b16 %v1392, %v1391
    %v1647 = vpack.c.b16 %v1394, %v1393
    %v1648 = vpack.c.b16 %v1396, %v1395
    %v1649 = vpack.c.b16 %v1398, %v1397
    %v1650 = vpack.c.b16 %v1400, %v1399
    %v1651 = vpack.c.b16 %v1402, %v1401
    %v1652 = vpack.c.b16 %v1404, %v1403
    %v1653 = vpack.c.b16 %v1406, %v1405
    %v1654 = vpack.c.b16 %v1408, %v1407
    %v1655 = vpack.c.b16 %v1410, %v1409
    %v1656 = vpack.c.b16 %v1412, %v1411
    %v1657 = vpack.c.b16 %v1414, %v1413
    %v1658 = vpack.c.b16 %v1416, %v1415
    %v1659 = vpack.c.b16 %v1418, %v1417
    %v1660 = vpack.c.b16 %v1420, %v1419
    %v1661 = vpack.c.b16 %v1422, %v1421
    %v1662 = vpack.c.b16 %v1424, %v1423
    %v1663 = vpack.c.b16 %v1426, %v1425
    %v1664 = vpack.c.b16 %v1428, %v1427
    %v1665 = vpack.c.b16 %v1430, %v1429
    %v1666 = vpack.c.b16 %v1432, %v1431
    %v1667 = vpack.c.b16 %v1434, %v1433
    %v1668 = vpack.c.b16 %v1436, %v1435
    %v1669 = vpack.c.b16 %v1438, %v1437
    %v1670 = vpack.c.b16 %v1440, %v1439
    %v1671 = vpack.c.b16 %v1442, %v1441
    %v1672 = vpack.c.b16 %v1444, %v1443
    %v1673 = vpack.c.b16 %v1446, %v1445
    %v1674 = vpack.c.b16 %v1448, %v1447
    %v1675 = vpack.c.b16 %v1450, %v1449
    %v1676 = vpack.c.b16 %v1452, %v1451
    %v1677 = vpack.c.b16 %v1454, %v1453
    %v1678 = vpack.c.b16 %v1456, %v1455
    %v1679 = vpack.c.b16 %v1458, %v1457
    %v1680 = vpack.c.b16 %v1460, %v1459
    %v1681 = vpack.c.b16 %v1462, %v1461
    %v1682 = vpack.c.b16 %v1464, %v1463
    %v1683 = vpack.c.b16 %v1466, %v1465
    %v1684 = vpack.c.b16 %v1468, %v1467
    %v1685 = vpack.c.b16 %v1470, %v1469
    %v1686 = vpack.c.b16 %v1472, %v1471
    %v1687 = vpack.c.b16 %v1474, %v1473
    %v1688 = vpack.c.b16 %v1476, %v1475
    %v1689 = vpack.c.b16 %v1478, %v1477
    %v1690 = vpack.c.b16 %v1480, %v1479
    %v1691 = vpack.c.b16 %v1482, %v1481
    %v1692 = vpack.c.b16 %v1484, %v1483
    %v1693 = vpack.c.b16 %v1486, %v1485
    %v1694 = vpack.c.b16 %v1488, %v1487
    %v1695 = vpack.c.b16 %v1490, %v1489
    %v1696 = vpack.c.b16 %v1492, %v1491
    %v1697 = vpack.c.b16 %v1494, %v1493
    %v1698 = vpack.c.b16 %v1496, %v1495
    %v1699 = vpack.c.b16 %v1498, %v1497
    %v1700 = vpack.c.b16 %v1500, %v1499
    %v1701 = vpack.c.b16 %v1502, %v1501
    %v1702 = vpack.c.b16 %v1504, %v1503
    %v1703 = vpack.c.b16 %v1506, %v1505
    %v1704 = vpack.c.b16 %v1508, %v1507
    %v1705 = vpack.c.b16 %v1510, %v1509
    %v1706 = vpack.c.b16 %v1512, %v1511
    %v1707 = vpack.c.b16 %v1514, %v1513
    %v1708 = vpack.c.b16 %v1516, %v1515
    %1901 = vmatpush.bf16.msra.mxu0 %v1524
    %1902 = vmatpush.bf16.msra.mxu0 %v1523
    %1903 = vmatpush.bf16.msra.mxu0 %v1522
    %1904 = vmatpush.bf16.msra.mxu0 %v1521
    %1905 = vmatpush.bf16.msra.mxu0 %v1520
    %1906 = vmatpush.bf16.msra.mxu0 %v1519
    %1907 = vmatpush.bf16.msra.mxu0 %v1518
    %1908 = vmatpush.bf16.msra.mxu0 %v1517
    %1909 = vmatmul.bf16.gmra.mxu0 %v337
    %v1910 = vpop.f32.mrf.mxu0
    %v1911 = vadd.f32 %v747, %v1910
    %v1912 = vpop.f32.mrf.mxu0
    %v1913 = vadd.f32 %v747, %v1912
    %1914 = vdwg.mxu0
    %1915 = vmatpush.bf16.msra.mxu0 %v1532
    %1916 = vmatpush.bf16.msra.mxu0 %v1531
    %1917 = vmatpush.bf16.msra.mxu0 %v1530
    %1918 = vmatpush.bf16.msra.mxu0 %v1529
    %1919 = vmatpush.bf16.msra.mxu0 %v1528
    %1920 = vmatpush.bf16.msra.mxu0 %v1527
    %1921 = vmatpush.bf16.msra.mxu0 %v1526
    %1922 = vmatpush.bf16.msra.mxu0 %v1525
    %1923 = vmatmul.bf16.gmra.mxu0 %v338
    %v1924 = vpop.f32.mrf.mxu0
    %v1925 = vadd.f32 %v1911, %v1924
    %v1926 = vpop.f32.mrf.mxu0
    %v1927 = vadd.f32 %v1913, %v1926
    %1928 = vdwg.mxu0
    %1929 = vmatpush.bf16.msra.mxu0 %v1540
    %1930 = vmatpush.bf16.msra.mxu0 %v1539
    %1931 = vmatpush.bf16.msra.mxu0 %v1538
    %1932 = vmatpush.bf16.msra.mxu0 %v1537
    %1933 = vmatpush.bf16.msra.mxu0 %v1536
    %1934 = vmatpush.bf16.msra.mxu0 %v1535
    %1935 = vmatpush.bf16.msra.mxu0 %v1534
    %1936 = vmatpush.bf16.msra.mxu0 %v1533
    %1937 = vmatmul.bf16.gmra.mxu0 %v339
    %v1938 = vpop.f32.mrf.mxu0
    %v1939 = vadd.f32 %v1925, %v1938
    %v1940 = vpop.f32.mrf.mxu0
    %v1941 = vadd.f32 %v1927, %v1940
    %1942 = vdwg.mxu0
    %1943 = vmatpush.bf16.msra.mxu0 %v1548
    %1944 = vmatpush.bf16.msra.mxu0 %v1547
    %1945 = vmatpush.bf16.msra.mxu0 %v1546
    %1946 = vmatpush.bf16.msra.mxu0 %v1545
    %1947 = vmatpush.bf16.msra.mxu0 %v1544
    %1948 = vmatpush.bf16.msra.mxu0 %v1543
    %1949 = vmatpush.bf16.msra.mxu0 %v1542
    %1950 = vmatpush.bf16.msra.mxu0 %v1541
    %1951 = vmatmul.bf16.gmra.mxu0 %v340
    %v1952 = vpop.f32.mrf.mxu0
    %v1953 = vadd.f32 %v1939, %v1952
    %v1954 = vpop.f32.mrf.mxu0
    %v1955 = vadd.f32 %v1941, %v1954
    %1956 = vdwg.mxu0
    %1957 = vmatpush.bf16.msra.mxu0 %v1556
    %1958 = vmatpush.bf16.msra.mxu0 %v1555
    %1959 = vmatpush.bf16.msra.mxu0 %v1554
    %1960 = vmatpush.bf16.msra.mxu0 %v1553
    %1961 = vmatpush.bf16.msra.mxu0 %v1552
    %1962 = vmatpush.bf16.msra.mxu0 %v1551
    %1963 = vmatpush.bf16.msra.mxu0 %v1550
    %1964 = vmatpush.bf16.msra.mxu0 %v1549
    %1965 = vmatmul.bf16.gmra.mxu0 %v341
    %v1966 = vpop.f32.mrf.mxu0
    %v1967 = vadd.f32 %v1953, %v1966
    %v1968 = vpop.f32.mrf.mxu0
    %v1969 = vadd.f32 %v1955, %v1968
    %1970 = vdwg.mxu0
    %1971 = vmatpush.bf16.msra.mxu0 %v1564
    %1972 = vmatpush.bf16.msra.mxu0 %v1563
    %1973 = vmatpush.bf16.msra.mxu0 %v1562
    %1974 = vmatpush.bf16.msra.mxu0 %v1561
    %1975 = vmatpush.bf16.msra.mxu0 %v1560
    %1976 = vmatpush.bf16.msra.mxu0 %v1559
    %1977 = vmatpush.bf16.msra.mxu0 %v1558
    %1978 = vmatpush.bf16.msra.mxu0 %v1557
    %1979 = vmatmul.bf16.gmra.mxu0 %v342
    %v1980 = vpop.f32.mrf.mxu0
    %v1981 = vadd.f32 %v1967, %v1980
    %v1982 = vpop.f32.mrf.mxu0
    %v1983 = vadd.f32 %v1969, %v1982
    %1984 = vdwg.mxu0
    %1985 = vmatpush.bf16.msra.mxu0 %v1572
    %1986 = vmatpush.bf16.msra.mxu0 %v1571
    %1987 = vmatpush.bf16.msra.mxu0 %v1570
    %1988 = vmatpush.bf16.msra.mxu0 %v1569
    %1989 = vmatpush.bf16.msra.mxu0 %v1568
    %1990 = vmatpush.bf16.msra.mxu0 %v1567
    %1991 = vmatpush.bf16.msra.mxu0 %v1566
    %1992 = vmatpush.bf16.msra.mxu0 %v1565
    %1993 = vmatmul.bf16.gmra.mxu0 %v343
    %v1994 = vpop.f32.mrf.mxu0
    %v1995 = vadd.f32 %v1981, %v1994
    %v1996 = vpop.f32.mrf.mxu0
    %v1997 = vadd.f32 %v1983, %v1996
    %1998 = vdwg.mxu0
    %1999 = vmatpush.bf16.msra.mxu0 %v1580
    %2000 = vmatpush.bf16.msra.mxu0 %v1579
    %2001 = vmatpush.bf16.msra.mxu0 %v1578
    %2002 = vmatpush.bf16.msra.mxu0 %v1577
    %2003 = vmatpush.bf16.msra.mxu0 %v1576
    %2004 = vmatpush.bf16.msra.mxu0 %v1575
    %2005 = vmatpush.bf16.msra.mxu0 %v1574
    %2006 = vmatpush.bf16.msra.mxu0 %v1573
    %2007 = vmatmul.bf16.gmra.mxu0 %v344
    %v2008 = vpop.f32.mrf.mxu0
    %v2009 = vadd.f32 %v1995, %v2008
    %v2010 = vpop.f32.mrf.mxu0
    %v2011 = vadd.f32 %v1997, %v2010
    %2012 = vdwg.mxu0
    %2013 = vmatpush.bf16.msra.mxu0 %v1588
    %2014 = vmatpush.bf16.msra.mxu0 %v1587
    %2015 = vmatpush.bf16.msra.mxu0 %v1586
    %2016 = vmatpush.bf16.msra.mxu0 %v1585
    %2017 = vmatpush.bf16.msra.mxu0 %v1584
    %2018 = vmatpush.bf16.msra.mxu0 %v1583
    %2019 = vmatpush.bf16.msra.mxu0 %v1582
    %2020 = vmatpush.bf16.msra.mxu0 %v1581
    %2021 = vmatmul.bf16.gmra.mxu0 %v345
    %v2022 = vpop.f32.mrf.mxu0
    %v2023 = vadd.f32 %v2009, %v2022
    %v2024 = vpop.f32.mrf.mxu0
    %v2025 = vadd.f32 %v2011, %v2024
    %2026 = vdwg.mxu0
    %2027 = vmatpush.bf16.msra.mxu0 %v1596
    %2028 = vmatpush.bf16.msra.mxu0 %v1595
    %2029 = vmatpush.bf16.msra.mxu0 %v1594
    %2030 = vmatpush.bf16.msra.mxu0 %v1593
    %2031 = vmatpush.bf16.msra.mxu0 %v1592
    %2032 = vmatpush.bf16.msra.mxu0 %v1591
    %2033 = vmatpush.bf16.msra.mxu0 %v1590
    %2034 = vmatpush.bf16.msra.mxu0 %v1589
    %2035 = vmatmul.bf16.gmra.mxu0 %v346
    %v2036 = vpop.f32.mrf.mxu0
    %v2037 = vadd.f32 %v2023, %v2036
    %v2038 = vpop.f32.mrf.mxu0
    %v2039 = vadd.f32 %v2025, %v2038
    %2040 = vdwg.mxu0
    %2041 = vmatpush.bf16.msra.mxu0 %v1604
    %2042 = vmatpush.bf16.msra.mxu0 %v1603
    %2043 = vmatpush.bf16.msra.mxu0 %v1602
    %2044 = vmatpush.bf16.msra.mxu0 %v1601
    %2045 = vmatpush.bf16.msra.mxu0 %v1600
    %2046 = vmatpush.bf16.msra.mxu0 %v1599
    %2047 = vmatpush.bf16.msra.mxu0 %v1598
    %2048 = vmatpush.bf16.msra.mxu0 %v1597
    %2049 = vmatmul.bf16.gmra.mxu0 %v347
    %v2050 = vpop.f32.mrf.mxu0
    %v2051 = vadd.f32 %v2037, %v2050
    %v2052 = vpop.f32.mrf.mxu0
    %v2053 = vadd.f32 %v2039, %v2052
    %2054 = vdwg.mxu0
    %2055 = vmatpush.bf16.msra.mxu0 %v1612
    %2056 = vmatpush.bf16.msra.mxu0 %v1611
    %2057 = vmatpush.bf16.msra.mxu0 %v1610
    %2058 = vmatpush.bf16.msra.mxu0 %v1609
    %2059 = vmatpush.bf16.msra.mxu0 %v1608
    %2060 = vmatpush.bf16.msra.mxu0 %v1607
    %2061 = vmatpush.bf16.msra.mxu0 %v1606
    %2062 = vmatpush.bf16.msra.mxu0 %v1605
    %2063 = vmatmul.bf16.gmra.mxu0 %v348
    %v2064 = vpop.f32.mrf.mxu0
    %v2065 = vadd.f32 %v2051, %v2064
    %v2066 = vpop.f32.mrf.mxu0
    %v2067 = vadd.f32 %v2053, %v2066
    %2068 = vdwg.mxu0
    %2069 = vmatpush.bf16.msra.mxu0 %v1620
    %2070 = vmatpush.bf16.msra.mxu0 %v1619
    %2071 = vmatpush.bf16.msra.mxu0 %v1618
    %2072 = vmatpush.bf16.msra.mxu0 %v1617
    %2073 = vmatpush.bf16.msra.mxu0 %v1616
    %2074 = vmatpush.bf16.msra.mxu0 %v1615
    %2075 = vmatpush.bf16.msra.mxu0 %v1614
    %2076 = vmatpush.bf16.msra.mxu0 %v1613
    %2077 = vmatmul.bf16.gmra.mxu0 %v349
    %v2078 = vpop.f32.mrf.mxu0
    %v2079 = vadd.f32 %v2065, %v2078
    %v2080 = vpop.f32.mrf.mxu0
    %v2081 = vadd.f32 %v2067, %v2080
    %2082 = vdwg.mxu0
    %2083 = vmatpush.bf16.msra.mxu0 %v1628
    %2084 = vmatpush.bf16.msra.mxu0 %v1627
    %2085 = vmatpush.bf16.msra.mxu0 %v1626
    %2086 = vmatpush.bf16.msra.mxu0 %v1625
    %2087 = vmatpush.bf16.msra.mxu0 %v1624
    %2088 = vmatpush.bf16.msra.mxu0 %v1623
    %2089 = vmatpush.bf16.msra.mxu0 %v1622
    %2090 = vmatpush.bf16.msra.mxu0 %v1621
    %2091 = vmatmul.bf16.gmra.mxu0 %v350
    %v2092 = vpop.f32.mrf.mxu0
    %v2093 = vadd.f32 %v2079, %v2092
    %v2094 = vpop.f32.mrf.mxu0
    %v2095 = vadd.f32 %v2081, %v2094
    %2096 = vdwg.mxu0
    %2097 = vmatpush.bf16.msra.mxu0 %v1636
    %2098 = vmatpush.bf16.msra.mxu0 %v1635
    %2099 = vmatpush.bf16.msra.mxu0 %v1634
    %2100 = vmatpush.bf16.msra.mxu0 %v1633
    %2101 = vmatpush.bf16.msra.mxu0 %v1632
    %2102 = vmatpush.bf16.msra.mxu0 %v1631
    %2103 = vmatpush.bf16.msra.mxu0 %v1630
    %2104 = vmatpush.bf16.msra.mxu0 %v1629
    %2105 = vmatmul.bf16.gmra.mxu0 %v351
    %v2106 = vpop.f32.mrf.mxu0
    %v2107 = vadd.f32 %v2093, %v2106
    %v2108 = vpop.f32.mrf.mxu0
    %v2109 = vadd.f32 %v2095, %v2108
    %2110 = vdwg.mxu0
    %2111 = vmatpush.bf16.msra.mxu0 %v1644
    %2112 = vmatpush.bf16.msra.mxu0 %v1643
    %2113 = vmatpush.bf16.msra.mxu0 %v1642
    %2114 = vmatpush.bf16.msra.mxu0 %v1641
    %2115 = vmatpush.bf16.msra.mxu0 %v1640
    %2116 = vmatpush.bf16.msra.mxu0 %v1639
    %2117 = vmatpush.bf16.msra.mxu0 %v1638
    %2118 = vmatpush.bf16.msra.mxu0 %v1637
    %2119 = vmatmul.bf16.gmra.mxu0 %v352
    %v2120 = vpop.f32.mrf.mxu0
    %v2121 = vadd.f32 %v2107, %v2120
    %v2122 = vpop.f32.mrf.mxu0
    %v2123 = vadd.f32 %v2109, %v2122
    %2124 = vdwg.mxu0
    %2125 = vmatpush.bf16.msra.mxu0 %v1652
    %2126 = vmatpush.bf16.msra.mxu0 %v1651
    %2127 = vmatpush.bf16.msra.mxu0 %v1650
    %2128 = vmatpush.bf16.msra.mxu0 %v1649
    %2129 = vmatpush.bf16.msra.mxu0 %v1648
    %2130 = vmatpush.bf16.msra.mxu0 %v1647
    %2131 = vmatpush.bf16.msra.mxu0 %v1646
    %2132 = vmatpush.bf16.msra.mxu0 %v1645
    %2133 = vmatmul.bf16.gmra.mxu0 %v353
    %v2134 = vpop.f32.mrf.mxu0
    %v2135 = vadd.f32 %v2121, %v2134
    %v2136 = vpop.f32.mrf.mxu0
    %v2137 = vadd.f32 %v2123, %v2136
    %2138 = vdwg.mxu0
    %2139 = vmatpush.bf16.msra.mxu0 %v1660
    %2140 = vmatpush.bf16.msra.mxu0 %v1659
    %2141 = vmatpush.bf16.msra.mxu0 %v1658
    %2142 = vmatpush.bf16.msra.mxu0 %v1657
    %2143 = vmatpush.bf16.msra.mxu0 %v1656
    %2144 = vmatpush.bf16.msra.mxu0 %v1655
    %2145 = vmatpush.bf16.msra.mxu0 %v1654
    %2146 = vmatpush.bf16.msra.mxu0 %v1653
    %2147 = vmatmul.bf16.gmra.mxu0 %v354
    %v2148 = vpop.f32.mrf.mxu0
    %v2149 = vadd.f32 %v2135, %v2148
    %v2150 = vpop.f32.mrf.mxu0
    %v2151 = vadd.f32 %v2137, %v2150
    %2152 = vdwg.mxu0
    %2153 = vmatpush.bf16.msra.mxu0 %v1668
    %2154 = vmatpush.bf16.msra.mxu0 %v1667
    %2155 = vmatpush.bf16.msra.mxu0 %v1666
    %2156 = vmatpush.bf16.msra.mxu0 %v1665
    %2157 = vmatpush.bf16.msra.mxu0 %v1664
    %2158 = vmatpush.bf16.msra.mxu0 %v1663
    %2159 = vmatpush.bf16.msra.mxu0 %v1662
    %2160 = vmatpush.bf16.msra.mxu0 %v1661
    %2161 = vmatmul.bf16.gmra.mxu0 %v355
    %v2162 = vpop.f32.mrf.mxu0
    %v2163 = vadd.f32 %v2149, %v2162
    %v2164 = vpop.f32.mrf.mxu0
    %v2165 = vadd.f32 %v2151, %v2164
    %2166 = vdwg.mxu0
    %2167 = vmatpush.bf16.msra.mxu0 %v1676
    %2168 = vmatpush.bf16.msra.mxu0 %v1675
    %2169 = vmatpush.bf16.msra.mxu0 %v1674
    %2170 = vmatpush.bf16.msra.mxu0 %v1673
    %2171 = vmatpush.bf16.msra.mxu0 %v1672
    %2172 = vmatpush.bf16.msra.mxu0 %v1671
    %2173 = vmatpush.bf16.msra.mxu0 %v1670
    %2174 = vmatpush.bf16.msra.mxu0 %v1669
    %2175 = vmatmul.bf16.gmra.mxu0 %v356
    %v2176 = vpop.f32.mrf.mxu0
    %v2177 = vadd.f32 %v2163, %v2176
    %v2178 = vpop.f32.mrf.mxu0
    %v2179 = vadd.f32 %v2165, %v2178
    %2180 = vdwg.mxu0
    %2181 = vmatpush.bf16.msra.mxu0 %v1684
    %2182 = vmatpush.bf16.msra.mxu0 %v1683
    %2183 = vmatpush.bf16.msra.mxu0 %v1682
    %2184 = vmatpush.bf16.msra.mxu0 %v1681
    %2185 = vmatpush.bf16.msra.mxu0 %v1680
    %2186 = vmatpush.bf16.msra.mxu0 %v1679
    %2187 = vmatpush.bf16.msra.mxu0 %v1678
    %2188 = vmatpush.bf16.msra.mxu0 %v1677
    %2189 = vmatmul.bf16.gmra.mxu0 %v357
    %v2190 = vpop.f32.mrf.mxu0
    %v2191 = vadd.f32 %v2177, %v2190
    %v2192 = vpop.f32.mrf.mxu0
    %v2193 = vadd.f32 %v2179, %v2192
    %2194 = vdwg.mxu0
    %2195 = vmatpush.bf16.msra.mxu0 %v1692
    %2196 = vmatpush.bf16.msra.mxu0 %v1691
    %2197 = vmatpush.bf16.msra.mxu0 %v1690
    %2198 = vmatpush.bf16.msra.mxu0 %v1689
    %2199 = vmatpush.bf16.msra.mxu0 %v1688
    %2200 = vmatpush.bf16.msra.mxu0 %v1687
    %2201 = vmatpush.bf16.msra.mxu0 %v1686
    %2202 = vmatpush.bf16.msra.mxu0 %v1685
    %2203 = vmatmul.bf16.gmra.mxu0 %v358
    %v2204 = vpop.f32.mrf.mxu0
    %v2205 = vadd.f32 %v2191, %v2204
    %v2206 = vpop.f32.mrf.mxu0
    %v2207 = vadd.f32 %v2193, %v2206
    %2208 = vdwg.mxu0
    %2209 = vmatpush.bf16.msra.mxu0 %v1700
    %2210 = vmatpush.bf16.msra.mxu0 %v1699
    %2211 = vmatpush.bf16.msra.mxu0 %v1698
    %2212 = vmatpush.bf16.msra.mxu0 %v1697
    %2213 = vmatpush.bf16.msra.mxu0 %v1696
    %2214 = vmatpush.bf16.msra.mxu0 %v1695
    %2215 = vmatpush.bf16.msra.mxu0 %v1694
    %2216 = vmatpush.bf16.msra.mxu0 %v1693
    %2217 = vmatmul.bf16.gmra.mxu0 %v359
    %v2218 = vpop.f32.mrf.mxu0
    %v2219 = vadd.f32 %v2205, %v2218
    %v2220 = vpop.f32.mrf.mxu0
    %v2221 = vadd.f32 %v2207, %v2220
    %2222 = vdwg.mxu0
    %2223 = vmatpush.bf16.msra.mxu0 %v1708
    %2224 = vmatpush.bf16.msra.mxu0 %v1707
    %2225 = vmatpush.bf16.msra.mxu0 %v1706
    %2226 = vmatpush.bf16.msra.mxu0 %v1705
    %2227 = vmatpush.bf16.msra.mxu0 %v1704
    %2228 = vmatpush.bf16.msra.mxu0 %v1703
    %2229 = vmatpush.bf16.msra.mxu0 %v1702
    %2230 = vmatpush.bf16.msra.mxu0 %v1701
    %2231 = vmatmul.bf16.gmra.mxu0 %v360
    %v2232 = vpop.f32.mrf.mxu0
    %v2233 = vadd.f32 %v2219, %v2232
    %v2234 = vpop.f32.mrf.mxu0
    %v2235 = vadd.f32 %v2221, %v2234
    %2236 = vdwg.mxu0
    %v2237 = vmax.f32 %v2233, 0.0
    %v2238 = vmax.f32 %v2235, 0.0
    %v2239 = vpack.c.bf16 %v2238, %v2237
    %v2240 = vld [vmem:[#allocation7] sm:$0xf]
    %v2241 = vld [vmem:[#allocation7 + $0x4] sm:$0xf]
    %v2242 = vld [vmem:[#allocation7 + $0x8] sm:$0xf]
    %v2243 = vld [vmem:[#allocation7 + $0xc] sm:$0xf]
    %v2244 = vld [vmem:[#allocation7 + $0x10] sm:$0xf]
    %v2245 = vld [vmem:[#allocation7 + $0x14] sm:$0xf]
    %v2246 = vld [vmem:[#allocation7 + $0x18] sm:$0xf]
    %v2247 = vld [vmem:[#allocation7 + $0x1c] sm:$0xf]
    %v2248 = vld [vmem:[#allocation7 + $0x20] sm:$0xf]
    %v2249 = vld [vmem:[#allocation7 + $0x24] sm:$0xf]
    %v2250 = vld [vmem:[#allocation7 + $0x28] sm:$0xf]
    %v2251 = vld [vmem:[#allocation7 + $0x2c] sm:$0xf]
    %v2252 = vld [vmem:[#allocation7 + $0x30] sm:$0xf]
    %v2253 = vld [vmem:[#allocation7 + $0x34] sm:$0xf]
    %v2254 = vld [vmem:[#allocation7 + $0x38] sm:$0xf]
    %v2255 = vld [vmem:[#allocation7 + $0x3c] sm:$0xf]
    %v2256 = vld [vmem:[%s4] sm:$0x1]
    %v2258 = vperm.slane %v2256, 0
    %v2276 = vunpack.c.l.b16 %v2240
    %v2277 = vunpack.c.l.b16 %v2241
    %v2278 = vunpack.c.l.b16 %v2242
    %v2279 = vunpack.c.l.b16 %v2243
    %v2280 = vunpack.c.l.b16 %v2244
    %v2281 = vunpack.c.l.b16 %v2245
    %v2282 = vunpack.c.l.b16 %v2246
    %v2283 = vunpack.c.l.b16 %v2247
    %v2284 = vunpack.c.l.b16 %v2248
    %v2285 = vunpack.c.l.b16 %v2249
    %v2286 = vunpack.c.l.b16 %v2250
    %v2287 = vunpack.c.l.b16 %v2251
    %v2288 = vunpack.c.l.b16 %v2252
    %v2289 = vunpack.c.l.b16 %v2253
    %v2290 = vunpack.c.l.b16 %v2254
    %v2291 = vunpack.c.l.b16 %v2255
    %v2292 = vpack.c.b16 %v2277, %v2276
    %v2293 = vpack.c.b16 %v2279, %v2278
    %v2294 = vpack.c.b16 %v2281, %v2280
    %v2295 = vpack.c.b16 %v2283, %v2282
    %v2296 = vpack.c.b16 %v2285, %v2284
    %v2297 = vpack.c.b16 %v2287, %v2286
    %v2298 = vpack.c.b16 %v2289, %v2288
    %v2299 = vpack.c.b16 %v2291, %v2290
    %2308 = vmatpush.bf16.msra.mxu0 %v2299
    %2309 = vmatpush.bf16.msra.mxu0 %v2298
    %2310 = vmatpush.bf16.msra.mxu0 %v2297
    %2311 = vmatpush.bf16.msra.mxu0 %v2296
    %2312 = vmatpush.bf16.msra.mxu0 %v2295
    %2313 = vmatpush.bf16.msra.mxu0 %v2294
    %2314 = vmatpush.bf16.msra.mxu0 %v2293
    %2315 = vmatpush.bf16.msra.mxu0 %v2292
    %2316 = vmatmul.bf16.gmra.mxu0 %v2239
    %v2317 = vpop.f32.mrf.mxu0
    %v2318 = vadd.f32 %v2258, %v2317
    %v2319 = vpop.f32.mrf.mxu0
    %v2320 = vadd.f32 %v2258, %v2319
    %2321 = vdwg.mxu0
    %v2322 = vmax.f32 %v2318, 0.0
    %v2323 = vmax.f32 %v2320, 0.0
    %v2324 = vpack.c.bf16 %v2323, %v2322
    %v2325 = vld [vmem:[#allocation8] sm:$0xf]
    %v2326 = vld [vmem:[#allocation8 + $0x4] sm:$0xf]
    %v2327 = vld [vmem:[#allocation8 + $0x8] sm:$0xf]
    %v2328 = vld [vmem:[#allocation8 + $0xc] sm:$0xf]
    %v2329 = vld [vmem:[#allocation8 + $0x10] sm:$0xf]
    %v2330 = vld [vmem:[#allocation8 + $0x14] sm:$0xf]
    %v2331 = vld [vmem:[#allocation8 + $0x18] sm:$0xf]
    %v2332 = vld [vmem:[#allocation8 + $0x1c] sm:$0xf]
    %v2333 = vld [vmem:[#allocation8 + $0x20] sm:$0xf]
    %v2334 = vld [vmem:[#allocation8 + $0x24] sm:$0xf]
    %v2335 = vld [vmem:[#allocation8 + $0x28] sm:$0xf]
    %v2336 = vld [vmem:[#allocation8 + $0x2c] sm:$0xf]
    %v2337 = vld [vmem:[#allocation8 + $0x30] sm:$0xf]
    %v2338 = vld [vmem:[#allocation8 + $0x34] sm:$0xf]
    %v2339 = vld [vmem:[#allocation8 + $0x38] sm:$0xf]
    %v2340 = vld [vmem:[#allocation8 + $0x3c] sm:$0xf]
    %v2341 = vld [vmem:[%s6] sm:$0x1]
    %v2343 = vperm.slane %v2341, 0
    %v2361 = vunpack.c.l.b16 %v2325
    %v2362 = vunpack.c.l.b16 %v2326
    %v2363 = vunpack.c.l.b16 %v2327
    %v2364 = vunpack.c.l.b16 %v2328
    %v2365 = vunpack.c.l.b16 %v2329
    %v2366 = vunpack.c.l.b16 %v2330
    %v2367 = vunpack.c.l.b16 %v2331
    %v2368 = vunpack.c.l.b16 %v2332
    %v2369 = vunpack.c.l.b16 %v2333
    %v2370 = vunpack.c.l.b16 %v2334
    %v2371 = vunpack.c.l.b16 %v2335
    %v2372 = vunpack.c.l.b16 %v2336
    %v2373 = vunpack.c.l.b16 %v2337
    %v2374 = vunpack.c.l.b16 %v2338
    %v2375 = vunpack.c.l.b16 %v2339
    %v2376 = vunpack.c.l.b16 %v2340
    %v2377 = vpack.c.b16 %v2362, %v2361
    %v2378 = vpack.c.b16 %v2364, %v2363
    %v2379 = vpack.c.b16 %v2366, %v2365
    %v2380 = vpack.c.b16 %v2368, %v2367
    %v2381 = vpack.c.b16 %v2370, %v2369
    %v2382 = vpack.c.b16 %v2372, %v2371
    %v2383 = vpack.c.b16 %v2374, %v2373
    %v2384 = vpack.c.b16 %v2376, %v2375
    %2393 = vmatpush.bf16.msra.mxu0 %v2384
    %2394 = vmatpush.bf16.msra.mxu0 %v2383
    %2395 = vmatpush.bf16.msra.mxu0 %v2382
    %2396 = vmatpush.bf16.msra.mxu0 %v2381
    %2397 = vmatpush.bf16.msra.mxu0 %v2380
    %2398 = vmatpush.bf16.msra.mxu0 %v2379
    %2399 = vmatpush.bf16.msra.mxu0 %v2378
    %2400 = vmatpush.bf16.msra.mxu0 %v2377
    %2401 = vmatmul.bf16.gmra.mxu0 %v2324
    %v2402 = vpop.f32.mrf.mxu0
    %v2403 = vadd.f32 %v2343, %v2402
    %v2404 = vpop.f32.mrf.mxu0
    %v2405 = vadd.f32 %v2343, %v2404
    %2406 = vdwg.mxu0
    %v2407 = vpack.c.bf16 %v2403, %v2403
    %v2408 = vpack.c.bf16 %v2405, %v2405
    %v2411 = vrot.slane %v2407, 3
    %v2412 = vrot.slane %v2408, 3
    %vm2413 = vcmask 1040384
    %v2416 = vsel %vm2413, %v2407, %v2411
    %vm2417 = vcmask 1041409
    %v2418 = vsel %vm2417, %v2407, %v2411
    %v2420 = vrot.slane %v2418, 1
    %vm2421 = vcmask 1042434
    %v2422 = vsel %vm2421, %v2407, %v2411
    %v2424 = vrot.slane %v2422, 2
    %vm2425 = vcmask 1043459
    %v2426 = vsel %vm2425, %v2407, %v2411
    %v2428 = vrot.slane %v2426, 3
    %v2431 = vsel %vm2413, %v2408, %v2412
    %v2432 = vsel %vm2417, %v2408, %v2412
    %v2434 = vrot.slane %v2432, 1
    %v2435 = vsel %vm2421, %v2408, %v2412
    %v2437 = vrot.slane %v2435, 2
    %v2438 = vsel %vm2425, %v2408, %v2412
    %v2440 = vrot.slane %v2438, 3
    %2449 = vst [vmem:[#allocation10] sm:$0x1] %v2416
    %2450 = vst [vmem:[#allocation10 + $0x1] sm:$0x1] %v2420
    %2451 = vst [vmem:[#allocation10 + $0x2] sm:$0x1] %v2424
    %2452 = vst [vmem:[#allocation10 + $0x3] sm:$0x1] %v2428
    %2453 = vst [vmem:[#allocation10 + $0x4] sm:$0x1] %v2431
    %2454 = vst [vmem:[#allocation10 + $0x5] sm:$0x1] %v2434
    %2455 = vst [vmem:[#allocation10 + $0x6] sm:$0x1] %v2437
    %2456 = vst [vmem:[#allocation10 + $0x7] sm:$0x1] %v2440
    // Predicated region
    $region46: #{tpu_custom_call.1} parent=1 // pred_check
      _
    $region47: #{tpu_custom_call.1} parent=1 // pred_check_branch
      %2458 = sbr.rel (0) target = $region49
    $region48: #{tpu_custom_call.1} parent=1 // pred_region
      %2460 = vsyncadd [#allocation4], 112
      %s2461 = sshll.u32 [#allocation10], 4
      %s2462 = int_to_ptr.vmem [resolvable:$true] %s2461
      %s2463 = sshll.u32 %s7, 4
      %s2464 = int_to_ptr.hbm [resolvable:$true] %s2463
      %2469 = dma.vmem_to_hbm [thread:$0]  %s2462, 16, %s2464, [#allocation4], 16, 16, 1
    $region49: #{tpu_custom_call.1} parent=1 // pred_fallthru
      _
    // Predicated region
    $region50: #{tpu_custom_call.1} parent=1 // pred_check
      _
    $region51: #{tpu_custom_call.1} parent=1 // pred_check_branch
      %2471 = sbr.rel (0) target = $region53
    $region52: #{tpu_custom_call.1} parent=1 // pred_region
      %2473 = dma.done [#allocation4], 128
    $region53: #{tpu_custom_call.1} parent=1 // pred_fallthru
      _
    %2474 = vsyncpa [#allocation3], 1
    %2475 = vsyncpa [#allocation6], 1
    %2476 = vsyncpa [#allocation9], 1
    %2477 = vsyncpa [#allocation4], 1

</llo_original>
